<compile_context>
chip_gen: v5e
topology: v5e:2x2
jax: 0.10.0
libtpu: 0.0.40
codegen_flags: <defaults>
</compile_context>

<pallas_src>
import functools

import jax
import jax.numpy as jnp
import numpy as np
from jax import lax
from jax.experimental import pallas as pl
from jax.experimental.pallas import tpu as pltpu

KSIZE = 4
STRIDE = 2
LEAKY_SLOPE = 0.01
BN_EPS = 1e-5
DROPOUT_P = 0.5


# ----------------------------------------------------------------------------
# Kernel 1: phase-folded transposed conv (4 accumulating matmuls per sample,
# one per 2x2 window tap) + per-sample BN partial sums.  grid=(N,), "parallel".
# ----------------------------------------------------------------------------
def _deconv_kernel(x_ref, w_ref, y_ref, s_ref, ss_ref, *, hq, wq, cin):
    # x_ref : (1, hq+1, wq+1, cin)   bf16, input padded by 1 on each side
    # w_ref : (4, cin, 4*cout)       bf16, per-tap phase-folded weight panels
    # y_ref : (1, hq*wq, 4*cout)     bf16, conv output, phase-packed channels
    # s_ref, ss_ref : (1, 1, 4*cout) f32, per-sample sum / sum-of-squares
    acc = None
    for t, (dh, dw) in enumerate(((0, 0), (0, 1), (1, 0), (1, 1))):
        xt = x_ref[0, dh:dh + hq, dw:dw + wq, :].reshape(hq * wq, cin)
        part = jnp.dot(xt, w_ref[t], preferred_element_type=jnp.float32)
        acc = part if acc is None else acc + part

    y_ref[0] = acc.astype(y_ref.dtype)          # bf16 writeback
    # BN partial stats from the f32 accumulator (before the bf16 rounding).
    s_ref[0] = jnp.sum(acc, axis=0, keepdims=True)
    ss_ref[0] = jnp.sum(acc * acc, axis=0, keepdims=True)


# ----------------------------------------------------------------------------
# Kernel 2: fused BN-affine (gamma/beta and the Dropout2d channel mask folded
# into a per-(sample, channel) scale/shift) + LeakyReLU.  bf16 I/O, f32 math.
# Output aliases the y input.
# ----------------------------------------------------------------------------
def _bn_act_kernel(y_ref, scale_ref, shift_ref, o_ref):
    z = y_ref[0].astype(jnp.float32) * scale_ref[0] + shift_ref[0]
    o_ref[0] = jnp.maximum(z, LEAKY_SLOPE * z).astype(o_ref.dtype)


# ----------------------------------------------------------------------------
# Parameter prep: torch ConvTranspose2d weight (Cin, Cout, 4, 4) -> per-tap
# regular-conv panels (4, Cin, 4*Cout):
#   tap  t  = dh*2 + dw              (2x2 window offset into padded input)
#   col     = (ph*2 + pw)*Cout + co  (output parity phase)
#   val     = weight[ci, co, ph + 2*(1-dh), pw + 2*(1-dw)]
# ----------------------------------------------------------------------------
def _fold_weight(weight):
    cin, cout = weight.shape[0], weight.shape[1]
    wr = weight.reshape(cin, cout, 2, 2, 2, 2)    # (ci, co, a, ph, b, pw), kh=2a+ph
    wf = wr[:, :, ::-1, :, ::-1, :]               # a -> dh = 1-a, b -> dw = 1-b
    wt = jnp.transpose(wf, (2, 4, 0, 3, 5, 1))    # (dh, dw, ci, ph, pw, co)
    return wt.reshape(4, cin, 4 * cout)


def deconv_block(x_nchw, weight, bias, gamma, beta, drop_mask):
    # `bias` is accepted for module fidelity but unused: it cancels exactly in
    # training-mode BatchNorm (subtracted back out with the batch mean).
    del bias
    n, cin, h, w = x_nchw.shape
    cout = weight.shape[1]
    hq, wq = h + 1, w + 1                 # per-phase output extent
    hout, wout = 2 * hq, 2 * wq           # = 2h+2, 2w+2
    c4 = 4 * cout
    hwq = hq * wq

    # NCHW -> NHWC, pad 1 on each spatial side; bf16 matmul operands.
    x = jnp.transpose(x_nchw, (0, 2, 3, 1))
    x_pad = jnp.pad(x, ((0, 0), (1, 1), (1, 1), (0, 0))).astype(jnp.bfloat16)
    w_eff = _fold_weight(weight).astype(jnp.bfloat16)       # (4, cin, c4)

    cparams = pltpu.CompilerParams(
        dimension_semantics=("parallel",),        # no cross-grid accumulator
        vmem_limit_bytes=32 * 1024 * 1024,        # fits v7x's 64 MiB physical
    )

    y, s_part, ss_part = pl.pallas_call(
        functools.partial(_deconv_kernel, hq=hq, wq=wq, cin=cin),
        out_shape=(
            jax.ShapeDtypeStruct((n, hwq, c4), jnp.bfloat16),
            jax.ShapeDtypeStruct((n, 1, c4), jnp.float32),
            jax.ShapeDtypeStruct((n, 1, c4), jnp.float32),
        ),
        grid_spec=pltpu.PrefetchScalarGridSpec(
            num_scalar_prefetch=0,
            grid=(n,),
            in_specs=[
                pl.BlockSpec((1, h + 2, w + 2, cin), lambda i: (i, 0, 0, 0)),
                # Constant index map -> fetched once.  At production Cin/Cout
                # add pipeline_mode=pl.Buffered(1) to single-buffer it (v7x).
                pl.BlockSpec((4, cin, c4), lambda i: (0, 0, 0)),
            ],
            out_specs=[
                pl.BlockSpec((1, hwq, c4), lambda i: (i, 0, 0)),
                pl.BlockSpec((1, 1, c4), lambda i: (i, 0, 0)),
                pl.BlockSpec((1, 1, c4), lambda i: (i, 0, 0)),
            ],
        ),
        compiler_params=cparams,
    )(x_pad, w_eff)

    # --- BN finalization (tiny, O(N*Cout), done in XLA) -----------------------
    count = float(n * hout * wout)
    s_c = jnp.sum(s_part.reshape(n, 4, cout), axis=(0, 1))
    ss_c = jnp.sum(ss_part.reshape(n, 4, cout), axis=(0, 1))
    mean = s_c / count
    var = ss_c / count - mean * mean                          # biased variance
    inv = lax.rsqrt(var + BN_EPS)
    scale_c = gamma.astype(jnp.float32) * inv                 # (cout,)
    shift_c = beta.astype(jnp.float32) - mean * scale_c       # (cout,)
    # Fold the Dropout2d channel mask (>= 0) into the affine: LeakyReLU is
    # positively homogeneous, so mask * leaky(a) == leaky(mask * a).
    scale_nc = scale_c[None, :] * drop_mask                   # (n, cout)
    shift_nc = shift_c[None, :] * drop_mask
    scale_in = jnp.tile(scale_nc, (1, 4)).reshape(n, 1, c4)   # phase-packed
    shift_in = jnp.tile(shift_nc, (1, 4)).reshape(n, 1, c4)

    # NOTE: at production H/W/Cout add a parallel row-tile grid axis here
    # (blocks of ~2-8 MiB) so the DMA pipeline / both v7x TCs are engaged.
    out = pl.pallas_call(
        _bn_act_kernel,
        out_shape=jax.ShapeDtypeStruct((n, hwq, c4), jnp.bfloat16),
        grid_spec=pltpu.PrefetchScalarGridSpec(
            num_scalar_prefetch=0,
            grid=(n,),
            in_specs=[
                pl.BlockSpec((1, hwq, c4), lambda i: (i, 0, 0)),
                pl.BlockSpec((1, 1, c4), lambda i: (i, 0, 0)),
                pl.BlockSpec((1, 1, c4), lambda i: (i, 0, 0)),
            ],
            out_specs=pl.BlockSpec((1, hwq, c4), lambda i: (i, 0, 0)),
        ),
        input_output_aliases={0: 0},               # write result in place of y
        compiler_params=cparams,
    )(y, scale_in, shift_in)

    # Phase-packed (n, hq*wq, 4*cout) -> NCHW (n, cout, 2*hq, 2*wq): the one
    # interleave/transpose, done once in XLA (needed for NCHW anyway).
    out = out.reshape(n, hq, wq, 2, 2, cout)
    out = jnp.transpose(out, (0, 5, 1, 3, 2, 4))   # (n, co, q, ph, p, pw)
    return out.reshape(n, cout, hout, wout)        # bf16 output


# ----------------------------------------------------------------------------
# Pure-JAX reference (independent scatter formulation of conv-transpose).
# Conv operands are cast to bf16 to match the kernel's MXU input precision
# (f32 accumulation); everything downstream stays f32, so the comparison
# tolerance covers the kernel's bf16 intermediate/output rounding (~0.4% rel).
# ----------------------------------------------------------------------------
def _reference(x_nchw, weight, bias, gamma, beta, drop_mask):
    n, cin, h, w = x_nchw.shape
    cout = weight.shape[1]
    hout = (h - 1) * STRIDE + KSIZE
    wout = (w - 1) * STRIDE + KSIZE
    x = jnp.transpose(x_nchw, (0, 2, 3, 1)).astype(jnp.bfloat16)
    wgt = weight.astype(jnp.bfloat16)
    y = jnp.zeros((n, hout, wout, cout), jnp.float32)
    for kh in range(KSIZE):
        for kw in range(KSIZE):
            contrib = jnp.einsum("nhwi,io->nhwo", x, wgt[:, :, kh, kw],
                                 preferred_element_type=jnp.float32)
            y = y.at[:, kh:kh + 2 * h:2, kw:kw + 2 * w:2, :].add(contrib)
    y = y + bias                                   # kernel omits it: BN cancels
    mean = y.mean(axis=(0, 1, 2))
    var = y.var(axis=(0, 1, 2))
    z = (y - mean) / jnp.sqrt(var + BN_EPS) * gamma + beta
    z = jnp.where(z >= 0, z, LEAKY_SLOPE * z)
    z = z * drop_mask[:, None, None, :]
    return jnp.transpose(z, (0, 3, 1, 2))


if __name__ == "__main__":
    key = jax.random.PRNGKey(0)
    k_x, k_w, k_d = jax.random.split(key, 3)

    # H=W=15 -> per-phase output 16x16 (hq*wq = 256, multiple of 8) and
    # Cout=32 -> 4*Cout = 128 (lane-dense stores): the layout the review asks
    # for at real scale, realized directly at this small test shape.
    N, CIN, COUT, H, W = 2, 8, 32, 15, 15

    x = jax.random.normal(k_x, (N, CIN, H, W), jnp.float32)
    # ConvTranspose2d params: weight (Cin, Cout, KH, KW), bias (Cout,)
    weight = jax.random.normal(k_w, (CIN, COUT, KSIZE, KSIZE),
                               jnp.float32) * 0.1
    bias = jnp.linspace(-0.1, 0.1, COUT).astype(jnp.float32)
    # BatchNorm2d affine params (made non-trivial to exercise the fused affine)
    gamma = 1.0 + 0.1 * jnp.linspace(-1.0, 1.0, COUT).astype(jnp.float32)
    beta = jnp.linspace(-0.2, 0.2, COUT).astype(jnp.float32)
    # Dropout2d training-mode whole-channel mask, deterministic
    keep = jax.random.bernoulli(k_d, 1.0 - DROPOUT_P, (N, COUT))
    drop_mask = keep.astype(jnp.float32) / (1.0 - DROPOUT_P)

    fwd = jax.jit(deconv_block)
    out = jax.block_until_ready(fwd(x, weight, bias, gamma, beta, drop_mask))

    ref = _reference(x, weight, bias, gamma, beta, drop_mask)
    np.testing.assert_allclose(np.asarray(out.astype(jnp.float32)),
                               np.asarray(ref), rtol=2e-2, atol=2e-2)
    assert out.shape == (N, COUT, 2 * H + 2, 2 * W + 2)
    print("KERNEL_OK")
</pallas_src>

<mosaic_0001>
module attributes {stable_mosaic.version = 11 : i64} {
  func.func @_deconv_kernel(%arg0: i32, %arg1: memref<1x17x17x8xbf16, #tpu.memory_space<vmem>>, %arg2: memref<4x8x128xbf16, #tpu.memory_space<vmem>>, %arg3: memref<1x256x128xbf16, #tpu.memory_space<vmem>>, %arg4: memref<1x1x128xf32, #tpu.memory_space<vmem>>, %arg5: memref<1x1x128xf32, #tpu.memory_space<vmem>>) attributes {dimension_semantics = [#tpu.dimension_semantics<parallel>], iteration_bounds = array<i64: 2>, scalar_prefetch = 0 : i64, scratch_operands = 0 : i64, tpu.core_type = #tpu.core_type<tc>, window_params = [{transform_indices = @transform_0, window_bounds = array<i64: 1, 17, 17, 8>}, {pipeline_mode = #tpu.pipeline_mode<synchronous>, transform_indices = @transform_1, window_bounds = array<i64: 4, 8, 128>}, {transform_indices = @transform_2, window_bounds = array<i64: 1, 256, 128>}, {transform_indices = @transform_3, window_bounds = array<i64: 1, 1, 128>}, {transform_indices = @transform_4, window_bounds = array<i64: 1, 1, 128>}]} {
    %c0 = arith.constant 0 : index
    %c0_0 = arith.constant 0 : index
    %c0_1 = arith.constant 0 : index
    %c0_2 = arith.constant 0 : index
    %0 = vector.load %arg1[%c0, %c0_0, %c0_1, %c0_2] : memref<1x17x17x8xbf16, #tpu.memory_space<vmem>>, vector<1x16x16x8xbf16>
    %1 = vector.shape_cast %0 : vector<1x16x16x8xbf16> to vector<16x16x8xbf16>
    %2 = vector.shape_cast %1 : vector<16x16x8xbf16> to vector<256x8xbf16>
    %c0_3 = arith.constant 0 : index
    %c0_4 = arith.constant 0 : index
    %c0_5 = arith.constant 0 : index
    %3 = vector.load %arg2[%c0_3, %c0_4, %c0_5] : memref<4x8x128xbf16, #tpu.memory_space<vmem>>, vector<1x8x128xbf16>
    %4 = vector.shape_cast %3 : vector<1x8x128xbf16> to vector<8x128xbf16>
    %cst = arith.constant dense<0.000000e+00> : vector<256x128xf32>
    %5 = tpu.matmul %2, %4, %cst {dimension_numbers = #tpu.dot_dimension_numbers<[1], [0], [0], [1], [0, 0, 1, 1], [], []>} : vector<256x8xbf16>, vector<8x128xbf16>, vector<256x128xf32> -> vector<256x128xf32>
    %c0_6 = arith.constant 0 : index
    %c0_7 = arith.constant 0 : index
    %c1 = arith.constant 1 : index
    %c0_8 = arith.constant 0 : index
    %6 = vector.load %arg1[%c0_6, %c0_7, %c1, %c0_8] : memref<1x17x17x8xbf16, #tpu.memory_space<vmem>>, vector<1x16x16x8xbf16>
    %7 = vector.shape_cast %6 : vector<1x16x16x8xbf16> to vector<16x16x8xbf16>
    %8 = vector.shape_cast %7 : vector<16x16x8xbf16> to vector<256x8xbf16>
    %c1_9 = arith.constant 1 : index
    %c0_10 = arith.constant 0 : index
    %c0_11 = arith.constant 0 : index
    %9 = vector.load %arg2[%c1_9, %c0_10, %c0_11] : memref<4x8x128xbf16, #tpu.memory_space<vmem>>, vector<1x8x128xbf16>
    %10 = vector.shape_cast %9 : vector<1x8x128xbf16> to vector<8x128xbf16>
    %cst_12 = arith.constant dense<0.000000e+00> : vector<256x128xf32>
    %11 = tpu.matmul %8, %10, %cst_12 {dimension_numbers = #tpu.dot_dimension_numbers<[1], [0], [0], [1], [0, 0, 1, 1], [], []>} : vector<256x8xbf16>, vector<8x128xbf16>, vector<256x128xf32> -> vector<256x128xf32>
    %12 = arith.addf %5, %11 : vector<256x128xf32>
    %c0_13 = arith.constant 0 : index
    %c1_14 = arith.constant 1 : index
    %c0_15 = arith.constant 0 : index
    %c0_16 = arith.constant 0 : index
    %13 = vector.load %arg1[%c0_13, %c1_14, %c0_15, %c0_16] : memref<1x17x17x8xbf16, #tpu.memory_space<vmem>>, vector<1x16x16x8xbf16>
    %14 = vector.shape_cast %13 : vector<1x16x16x8xbf16> to vector<16x16x8xbf16>
    %15 = vector.shape_cast %14 : vector<16x16x8xbf16> to vector<256x8xbf16>
    %c2 = arith.constant 2 : index
    %c0_17 = arith.constant 0 : index
    %c0_18 = arith.constant 0 : index
    %16 = vector.load %arg2[%c2, %c0_17, %c0_18] : memref<4x8x128xbf16, #tpu.memory_space<vmem>>, vector<1x8x128xbf16>
    %17 = vector.shape_cast %16 : vector<1x8x128xbf16> to vector<8x128xbf16>
    %cst_19 = arith.constant dense<0.000000e+00> : vector<256x128xf32>
    %18 = tpu.matmul %15, %17, %cst_19 {dimension_numbers = #tpu.dot_dimension_numbers<[1], [0], [0], [1], [0, 0, 1, 1], [], []>} : vector<256x8xbf16>, vector<8x128xbf16>, vector<256x128xf32> -> vector<256x128xf32>
    %19 = arith.addf %12, %18 : vector<256x128xf32>
    %c0_20 = arith.constant 0 : index
    %c1_21 = arith.constant 1 : index
    %c1_22 = arith.constant 1 : index
    %c0_23 = arith.constant 0 : index
    %20 = vector.load %arg1[%c0_20, %c1_21, %c1_22, %c0_23] : memref<1x17x17x8xbf16, #tpu.memory_space<vmem>>, vector<1x16x16x8xbf16>
    %21 = vector.shape_cast %20 : vector<1x16x16x8xbf16> to vector<16x16x8xbf16>
    %22 = vector.shape_cast %21 : vector<16x16x8xbf16> to vector<256x8xbf16>
    %c3 = arith.constant 3 : index
    %c0_24 = arith.constant 0 : index
    %c0_25 = arith.constant 0 : index
    %23 = vector.load %arg2[%c3, %c0_24, %c0_25] : memref<4x8x128xbf16, #tpu.memory_space<vmem>>, vector<1x8x128xbf16>
    %24 = vector.shape_cast %23 : vector<1x8x128xbf16> to vector<8x128xbf16>
    %cst_26 = arith.constant dense<0.000000e+00> : vector<256x128xf32>
    %25 = tpu.matmul %22, %24, %cst_26 {dimension_numbers = #tpu.dot_dimension_numbers<[1], [0], [0], [1], [0, 0, 1, 1], [], []>} : vector<256x8xbf16>, vector<8x128xbf16>, vector<256x128xf32> -> vector<256x128xf32>
    %26 = arith.addf %19, %25 : vector<256x128xf32>
    %27 = arith.truncf %26 : vector<256x128xf32> to vector<256x128xbf16>
    %c0_27 = arith.constant 0 : index
    %c0_28 = arith.constant 0 : index
    %c0_29 = arith.constant 0 : index
    %28 = vector.load %arg3[%c0_27, %c0_28, %c0_29] : memref<1x256x128xbf16, #tpu.memory_space<vmem>>, vector<1x256x128xbf16>
    %29 = vector.shape_cast %28 : vector<1x256x128xbf16> to vector<256x128xbf16>
    %30 = vector.shape_cast %27 : vector<256x128xbf16> to vector<1x256x128xbf16>
    tpu.vector_store %arg3[%c0_27, %c0_28, %c0_29], %30 {strides = array<i32>} : memref<1x256x128xbf16, #tpu.memory_space<vmem>>, vector<1x256x128xbf16>,
    %cst_30 = arith.constant dense<0.000000e+00> : vector<128xf32>
    %31 = vector.multi_reduction <add>, %26, %cst_30 [0] : vector<256x128xf32> to vector<128xf32>
    %32 = vector.shape_cast %31 : vector<128xf32> to vector<1x128xf32>
    %c0_31 = arith.constant 0 : index
    %c0_32 = arith.constant 0 : index
    %c0_33 = arith.constant 0 : index
    %33 = vector.load %arg4[%c0_31, %c0_32, %c0_33] : memref<1x1x128xf32, #tpu.memory_space<vmem>>, vector<1x1x128xf32>
    %34 = vector.shape_cast %33 : vector<1x1x128xf32> to vector<1x128xf32>
    %35 = vector.shape_cast %32 : vector<1x128xf32> to vector<1x1x128xf32>
    tpu.vector_store %arg4[%c0_31, %c0_32, %c0_33], %35 {strides = array<i32>} : memref<1x1x128xf32, #tpu.memory_space<vmem>>, vector<1x1x128xf32>,
    %36 = arith.mulf %26, %26 : vector<256x128xf32>
    %cst_34 = arith.constant dense<0.000000e+00> : vector<128xf32>
    %37 = vector.multi_reduction <add>, %36, %cst_34 [0] : vector<256x128xf32> to vector<128xf32>
    %38 = vector.shape_cast %37 : vector<128xf32> to vector<1x128xf32>
    %c0_35 = arith.constant 0 : index
    %c0_36 = arith.constant 0 : index
    %c0_37 = arith.constant 0 : index
    %39 = vector.load %arg5[%c0_35, %c0_36, %c0_37] : memref<1x1x128xf32, #tpu.memory_space<vmem>>, vector<1x1x128xf32>
    %40 = vector.shape_cast %39 : vector<1x1x128xf32> to vector<1x128xf32>
    %41 = vector.shape_cast %38 : vector<1x128xf32> to vector<1x1x128xf32>
    tpu.vector_store %arg5[%c0_35, %c0_36, %c0_37], %41 {strides = array<i32>} : memref<1x1x128xf32, #tpu.memory_space<vmem>>, vector<1x1x128xf32>,
    return
  }
  func.func @transform_0(%arg0: i32) -> (i32, i32, i32, i32) {
    %c0_i32 = arith.constant 0 : i32
    %c0_i32_0 = arith.constant 0 : i32
    %c0_i32_1 = arith.constant 0 : i32
    %c0_i32_2 = arith.constant 0 : i32
    return %arg0, %c0_i32, %c0_i32_0, %c0_i32_1 : i32, i32, i32, i32
  }
  func.func @transform_1(%arg0: i32) -> (i32, i32, i32) {
    %c0_i32 = arith.constant 0 : i32
    %c0_i32_0 = arith.constant 0 : i32
    %c0_i32_1 = arith.constant 0 : i32
    %c0_i32_2 = arith.constant 0 : i32
    return %c0_i32, %c0_i32_0, %c0_i32_1 : i32, i32, i32
  }
  func.func @transform_2(%arg0: i32) -> (i32, i32, i32) {
    %c0_i32 = arith.constant 0 : i32
    %c0_i32_0 = arith.constant 0 : i32
    %c0_i32_1 = arith.constant 0 : i32
    return %arg0, %c0_i32, %c0_i32_0 : i32, i32, i32
  }
  func.func @transform_3(%arg0: i32) -> (i32, i32, i32) {
    %c0_i32 = arith.constant 0 : i32
    %c0_i32_0 = arith.constant 0 : i32
    %c0_i32_1 = arith.constant 0 : i32
    return %arg0, %c0_i32, %c0_i32_0 : i32, i32, i32
  }
  func.func @transform_4(%arg0: i32) -> (i32, i32, i32) {
    %c0_i32 = arith.constant 0 : i32
    %c0_i32_0 = arith.constant 0 : i32
    %c0_i32_1 = arith.constant 0 : i32
    return %arg0, %c0_i32, %c0_i32_0 : i32, i32, i32
  }
}

module attributes {stable_mosaic.version = 11 : i64} {
  func.func @_bn_act_kernel(%arg0: i32, %arg1: memref<1x256x128xbf16, #tpu.memory_space<vmem>>, %arg2: memref<1x1x128xf32, #tpu.memory_space<vmem>>, %arg3: memref<1x1x128xf32, #tpu.memory_space<vmem>>, %arg4: memref<1x256x128xbf16, #tpu.memory_space<vmem>>) attributes {dimension_semantics = [#tpu.dimension_semantics<parallel>], iteration_bounds = array<i64: 2>, scalar_prefetch = 0 : i64, scratch_operands = 0 : i64, tpu.core_type = #tpu.core_type<tc>, window_params = [{transform_indices = @transform_0, window_bounds = array<i64: 1, 256, 128>}, {transform_indices = @transform_1, window_bounds = array<i64: 1, 1, 128>}, {transform_indices = @transform_2, window_bounds = array<i64: 1, 1, 128>}, {transform_indices = @transform_3, window_bounds = array<i64: 1, 256, 128>}]} {
    %c0 = arith.constant 0 : index
    %c0_0 = arith.constant 0 : index
    %c0_1 = arith.constant 0 : index
    %0 = vector.load %arg1[%c0, %c0_0, %c0_1] : memref<1x256x128xbf16, #tpu.memory_space<vmem>>, vector<1x256x128xbf16>
    %1 = vector.shape_cast %0 : vector<1x256x128xbf16> to vector<256x128xbf16>
    %2 = arith.extf %1 : vector<256x128xbf16> to vector<256x128xf32>
    %c0_2 = arith.constant 0 : index
    %c0_3 = arith.constant 0 : index
    %c0_4 = arith.constant 0 : index
    %3 = vector.load %arg2[%c0_2, %c0_3, %c0_4] : memref<1x1x128xf32, #tpu.memory_space<vmem>>, vector<1x1x128xf32>
    %4 = vector.shape_cast %3 : vector<1x1x128xf32> to vector<1x128xf32>
    %5 = vector.broadcast %4 : vector<1x128xf32> to vector<256x128xf32>
    %6 = arith.mulf %2, %5 : vector<256x128xf32>
    %c0_5 = arith.constant 0 : index
    %c0_6 = arith.constant 0 : index
    %c0_7 = arith.constant 0 : index
    %7 = vector.load %arg3[%c0_5, %c0_6, %c0_7] : memref<1x1x128xf32, #tpu.memory_space<vmem>>, vector<1x1x128xf32>
    %8 = vector.shape_cast %7 : vector<1x1x128xf32> to vector<1x128xf32>
    %9 = vector.broadcast %8 : vector<1x128xf32> to vector<256x128xf32>
    %10 = arith.addf %6, %9 : vector<256x128xf32>
    %cst = arith.constant 0.00999999977 : f32
    %11 = vector.broadcast %cst : f32 to vector<256x128xf32>
    %12 = arith.mulf %11, %10 : vector<256x128xf32>
    %13 = arith.maximumf %10, %12 : vector<256x128xf32>
    %14 = arith.truncf %13 : vector<256x128xf32> to vector<256x128xbf16>
    %c0_8 = arith.constant 0 : index
    %c0_9 = arith.constant 0 : index
    %c0_10 = arith.constant 0 : index
    %15 = vector.load %arg4[%c0_8, %c0_9, %c0_10] : memref<1x256x128xbf16, #tpu.memory_space<vmem>>, vector<1x256x128xbf16>
    %16 = vector.shape_cast %15 : vector<1x256x128xbf16> to vector<256x128xbf16>
    %17 = vector.shape_cast %14 : vector<256x128xbf16> to vector<1x256x128xbf16>
    tpu.vector_store %arg4[%c0_8, %c0_9, %c0_10], %17 {strides = array<i32>} : memref<1x256x128xbf16, #tpu.memory_space<vmem>>, vector<1x256x128xbf16>,
    return
  }
  func.func @transform_0(%arg0: i32) -> (i32, i32, i32) {
    %c0_i32 = arith.constant 0 : i32
    %c0_i32_0 = arith.constant 0 : i32
    %c0_i32_1 = arith.constant 0 : i32
    return %arg0, %c0_i32, %c0_i32_0 : i32, i32, i32
  }
  func.func @transform_1(%arg0: i32) -> (i32, i32, i32) {
    %c0_i32 = arith.constant 0 : i32
    %c0_i32_0 = arith.constant 0 : i32
    %c0_i32_1 = arith.constant 0 : i32
    return %arg0, %c0_i32, %c0_i32_0 : i32, i32, i32
  }
  func.func @transform_2(%arg0: i32) -> (i32, i32, i32) {
    %c0_i32 = arith.constant 0 : i32
    %c0_i32_0 = arith.constant 0 : i32
    %c0_i32_1 = arith.constant 0 : i32
    return %arg0, %c0_i32, %c0_i32_0 : i32, i32, i32
  }
  func.func @transform_3(%arg0: i32) -> (i32, i32, i32) {
    %c0_i32 = arith.constant 0 : i32
    %c0_i32_0 = arith.constant 0 : i32
    %c0_i32_1 = arith.constant 0 : i32
    return %arg0, %c0_i32, %c0_i32_0 : i32, i32, i32
  }
}

</mosaic_0001>

<llo_original>
// kernel: deconv_block.3
$region0: #{deconv_block.3}
  #allocation0 [shape = 'u32[]', space=smem, size = 0x4, offset = 0x4, fixed_abs, tag = 'smem constant byte address 0x4 - core index']
  #allocation1 [shape = 'u32[72,128]{1,0:T(1,128)}', space=vmem, size = 0x9000, scoped, tag = 'internal scratch']
  %s0 = inlined_call_operand.vmem [shape: bf16[2,256,128], index: 0, kind: input, shape index: {}, may-alias: {0,3}]
  %s1 = inlined_call_operand.vmem [shape: f32[2,1,128], index: 1, kind: input, shape index: {}]
  %s2 = inlined_call_operand.vmem [shape: f32[2,1,128], index: 2, kind: input, shape index: {}]
  %s3 = inlined_call_operand.vmem [shape: bf16[2,256,128], index: 3, kind: output, shape index: {}, may-alias: {0,3}]
  %s4 = sld [smem:[#allocation0]]
  $region45: #{deconv_block.3} parent=0
    _
  %s6 = ssub.s32 1, %s4
  %s7 = scalar_select 0, %s6, %s4
  loop: start=0, step=1, limit=4
  $region2: #{deconv_block.3} parent=0 // loop_pre_header
    _
  $region3: #{deconv_block.3} parent=0 // loop_header
    %s9 = sphi 0, %s13
    %p10 = scmp.ge.s32.totalorder %s9, 4
    %s19 = sphi 0, %s21
    %s22 = sphi 0, %s19
    %s23 = sphi 0, %s22
    %s39 = sphi 0, %s23
    %s45 = sphi 0, %s47
    %s48 = sphi 0, %s45
    %s49 = sphi 0, %s48
    %s65 = sphi 0, %s49
    %s71 = sphi 0, %s73
    %s74 = sphi 0, %s71
    %s75 = sphi 0, %s74
    %s91 = sphi 0, %s75
    %s97 = sphi 0, %s99
    %s100 = sphi 0, %s97
    %s101 = sphi 0, %s100
    %s117 = sphi 0, %s101
  $region4: #{deconv_block.3} parent=0 // loop_header_branch
    %12 = sbr.rel (%p10) target = $region8
  $region5: #{deconv_block.3} parent=0 // loop_body
    %s14 = ssub.s32 %s9, 1
    %s15 = ssub.s32 %s9, 2
    %s16 = sadd.s32 %s9, 1
    %s17 = ssub.s32 %s9, %s16
    %p18 = scmp.eq.s32.totalorder %s17, 0
    %s20 = sadd.s32 %s19, 1
    %s21 = scalar_select %p18, %s19, %s20
    %p24 = pneg %p18
    %p25 = scmp.eq.s32.totalorder %s9, 1
    %p26 = por %p24, %p25
    %p27 = scmp.ne.s32.totalorder %s19, %s22
    %p28 = scmp.eq.s32.totalorder %s9, 0
    %p29 = por %p27, %p28
    %p30 = scmp.ne.s32.totalorder %s19, %s22
    %p31 = scmp.eq.s32.totalorder %s14, 1
    %p32 = por %p30, %p31
    %p33 = scmp.ne.s32.totalorder %s22, %s23
    %p34 = scmp.eq.s32.totalorder %s14, 0
    %p35 = por %p33, %p34
    %p36 = scmp.ne.s32.totalorder %s22, %s23
    %p37 = scmp.eq.s32.totalorder %s15, 1
    %p38 = por %p36, %p37
    %p40 = scmp.ne.s32.totalorder %s23, %s39
    %p41 = scmp.eq.s32.totalorder %s15, 0
    %p42 = por %p40, %p41
    %s43 = ssub.s32 %s9, %s16
    %p44 = scmp.eq.s32.totalorder %s43, 0
    %s46 = sadd.s32 %s45, 1
    %s47 = scalar_select %p44, %s45, %s46
    %p50 = pneg %p44
    %p51 = scmp.eq.s32.totalorder %s9, 1
    %p52 = por %p50, %p51
    %p53 = scmp.ne.s32.totalorder %s45, %s48
    %p54 = scmp.eq.s32.totalorder %s9, 0
    %p55 = por %p53, %p54
    %p56 = scmp.ne.s32.totalorder %s45, %s48
    %p57 = scmp.eq.s32.totalorder %s14, 1
    %p58 = por %p56, %p57
    %p59 = scmp.ne.s32.totalorder %s48, %s49
    %p60 = scmp.eq.s32.totalorder %s14, 0
    %p61 = por %p59, %p60
    %p62 = scmp.ne.s32.totalorder %s48, %s49
    %p63 = scmp.eq.s32.totalorder %s15, 1
    %p64 = por %p62, %p63
    %p66 = scmp.ne.s32.totalorder %s49, %s65
    %p67 = scmp.eq.s32.totalorder %s15, 0
    %p68 = por %p66, %p67
    %s69 = ssub.s32 %s9, %s16
    %p70 = scmp.eq.s32.totalorder %s69, 0
    %s72 = sadd.s32 %s71, 1
    %s73 = scalar_select %p70, %s71, %s72
    %p76 = pneg %p70
    %p77 = scmp.eq.s32.totalorder %s9, 1
    %p78 = por %p76, %p77
    %p79 = scmp.ne.s32.totalorder %s71, %s74
    %p80 = scmp.eq.s32.totalorder %s9, 0
    %p81 = por %p79, %p80
    %p82 = scmp.ne.s32.totalorder %s71, %s74
    %p83 = scmp.eq.s32.totalorder %s14, 1
    %p84 = por %p82, %p83
    %p85 = scmp.ne.s32.totalorder %s74, %s75
    %p86 = scmp.eq.s32.totalorder %s14, 0
    %p87 = por %p85, %p86
    %p88 = scmp.ne.s32.totalorder %s74, %s75
    %p89 = scmp.eq.s32.totalorder %s15, 1
    %p90 = por %p88, %p89
    %p92 = scmp.ne.s32.totalorder %s75, %s91
    %p93 = scmp.eq.s32.totalorder %s15, 0
    %p94 = por %p92, %p93
    %s95 = ssub.s32 %s9, %s16
    %p96 = scmp.eq.s32.totalorder %s95, 0
    %s98 = sadd.s32 %s97, 1
    %s99 = scalar_select %p96, %s97, %s98
    %p102 = pneg %p96
    %p103 = scmp.eq.s32.totalorder %s9, 1
    %p104 = por %p102, %p103
    %p105 = scmp.ne.s32.totalorder %s97, %s100
    %p106 = scmp.eq.s32.totalorder %s9, 0
    %p107 = por %p105, %p106
    %p108 = scmp.ne.s32.totalorder %s97, %s100
    %p109 = scmp.eq.s32.totalorder %s14, 1
    %p110 = por %p108, %p109
    %p111 = scmp.ne.s32.totalorder %s100, %s101
    %p112 = scmp.eq.s32.totalorder %s14, 0
    %p113 = por %p111, %p112
    %p114 = scmp.ne.s32.totalorder %s100, %s101
    %p115 = scmp.eq.s32.totalorder %s15, 1
    %p116 = por %p114, %p115
    %p118 = scmp.ne.s32.totalorder %s101, %s117
    %p119 = scmp.eq.s32.totalorder %s15, 0
    %p120 = por %p118, %p119
    %p121 = scmp.le.s32.totalorder 1, %s9
    %p122 = scmp.lt.s32.totalorder %s9, 3
    %p123 = pnand %p121, %p122
    %p124 = pneg %p123
    // Predicated region
    $region9: #{deconv_block.3} parent=5 // pred_check
      _
    $region10: #{deconv_block.3} parent=5 // pred_check_branch
      %126 = sbr.rel (%p123) target = $region12
    $region11: #{deconv_block.3} parent=5 // pred_region
      %s127 = ssub.s32 %s9, 1
    $region12: #{deconv_block.3} parent=5 // pred_fallthru
      _
    %p128 = scmp.lt.s32.totalorder %s9, 2
    // Predicated region
    $region13: #{deconv_block.3} parent=5 // pred_check
      %p129 = pneg %p128
    $region14: #{deconv_block.3} parent=5 // pred_check_branch
      %131 = sbr.rel (%p129) target = $region16
    $region15: #{deconv_block.3} parent=5 // pred_region
      // Predicated region
      $region17: #{deconv_block.3} parent=15 // pred_check
        %p132 = pneg %p29
      $region18: #{deconv_block.3} parent=15 // pred_check_branch
        %134 = sbr.rel (%p132) target = $region20
      $region19: #{deconv_block.3} parent=15 // pred_region
        %p135 = scmp.lt.s32.totalorder %s9, 1
        %s136 = scalar_select %p135, %s9, 1
        %s137 = smul.addr %s136, 32
        %s138 = smul.addr %s137, 4
        %s139 = scalar_lea.vmem %s0, %s138
      $region20: #{deconv_block.3} parent=15 // pred_fallthru
        _
      // Predicated region
      $region21: #{deconv_block.3} parent=15 // pred_check
        %p140 = pneg %p55
      $region22: #{deconv_block.3} parent=15 // pred_check_branch
        %142 = sbr.rel (%p140) target = $region24
      $region23: #{deconv_block.3} parent=15 // pred_region
        %p143 = scmp.lt.s32.totalorder %s9, 1
        %s144 = scalar_select %p143, %s9, 1
        %s145 = scalar_lea.vmem %s1, %s144
      $region24: #{deconv_block.3} parent=15 // pred_fallthru
        _
      // Predicated region
      $region25: #{deconv_block.3} parent=15 // pred_check
        %p146 = pneg %p81
      $region26: #{deconv_block.3} parent=15 // pred_check_branch
        %148 = sbr.rel (%p146) target = $region28
      $region27: #{deconv_block.3} parent=15 // pred_region
        %p149 = scmp.lt.s32.totalorder %s9, 1
        %s150 = scalar_select %p149, %s9, 1
        %s151 = scalar_lea.vmem %s2, %s150
      $region28: #{deconv_block.3} parent=15 // pred_fallthru
        _
    $region16: #{deconv_block.3} parent=5 // pred_fallthru
      _
    %p152 = scmp.le.s32.totalorder 1, %s9
    %p153 = scmp.lt.s32.totalorder %s9, 3
    %p154 = pnand %p152, %p153
    %p155 = pneg %p154
    // Predicated region
    $region29: #{deconv_block.3} parent=5 // pred_check
      _
    $region30: #{deconv_block.3} parent=5 // pred_check_branch
      %157 = sbr.rel (%p154) target = $region32
    $region31: #{deconv_block.3} parent=5 // pred_region
      %s158 = ssub.s32 %s9, 1
      %p159 = scmp.lt.s32.totalorder %s14, 1
      %s160 = scalar_select %p159, %s14, 1
      %s161 = smul.addr %s160, 32
      %s162 = smul.addr %s161, 4
      %s163 = scalar_lea.vmem %s0, %s162
      %p164 = pneg %p35
      %p165 = pneg %p32
      %p166 = scmp.lt.s32.totalorder %s14, 1
      %s167 = scalar_select %p166, %s14, 1
      %s168 = scalar_lea.vmem %s1, %s167
      %p169 = pneg %p61
      %p170 = pneg %p58
      %p171 = scmp.lt.s32.totalorder %s14, 1
      %s172 = scalar_select %p171, %s14, 1
      %s173 = scalar_lea.vmem %s2, %s172
      %p174 = pneg %p87
      %p175 = pneg %p84
      %p176 = pneg %p113
      %p177 = pneg %p110
      %p178 = scmp.lt.s32.totalorder %s14, 1
      %s179 = scalar_select %p178, %s14, 1
      %s180 = smul.addr %s179, 32
      %s181 = smul.addr %s180, 4
      %s182 = scalar_lea.vmem %s3, %s181
      %p183 = scmp.lt.s32.totalorder %s14, 1
      %s184 = scalar_select %p183, %s14, 1
      %s185 = smul.addr %s184, 32
      %s186 = smul.addr %s185, 4
      %s187 = scalar_lea.vmem %s0, %s186
      %p188 = scmp.lt.s32.totalorder %s14, 1
      %s189 = scalar_select %p188, %s14, 1
      %s190 = scalar_lea.vmem %s1, %s189
      %p191 = scmp.lt.s32.totalorder %s14, 1
      %s192 = scalar_select %p191, %s14, 1
      %s193 = scalar_lea.vmem %s2, %s192
      %p194 = scmp.lt.s32.totalorder %s14, 1
      %s195 = scalar_select %p194, %s14, 1
      %s196 = smul.addr %s195, 32
      %s197 = smul.addr %s196, 4
      %s198 = scalar_lea.vmem %s3, %s197
      %v199 = vld [vmem:[%s187] sm:$0xf]
      %v200 = vld [vmem:[%s187 + $0x4] sm:$0xf]
      %v201 = vld [vmem:[%s187 + $0x8] sm:$0xf]
      %v202 = vld [vmem:[%s187 + $0xc] sm:$0xf]
      %v203 = vld [vmem:[%s187 + $0x10] sm:$0xf]
      %v204 = vld [vmem:[%s187 + $0x14] sm:$0xf]
      %v205 = vld [vmem:[%s187 + $0x18] sm:$0xf]
      %v206 = vld [vmem:[%s187 + $0x1c] sm:$0xf]
      %v207 = vld [vmem:[%s187 + $0x20] sm:$0xf]
      %v208 = vld [vmem:[%s187 + $0x24] sm:$0xf]
      %v209 = vld [vmem:[%s187 + $0x28] sm:$0xf]
      %v210 = vld [vmem:[%s187 + $0x2c] sm:$0xf]
      %v211 = vld [vmem:[%s187 + $0x30] sm:$0xf]
      %v212 = vld [vmem:[%s187 + $0x34] sm:$0xf]
      %v213 = vld [vmem:[%s187 + $0x38] sm:$0xf]
      %v214 = vld [vmem:[%s187 + $0x3c] sm:$0xf]
      %v215 = vld [vmem:[%s187 + $0x40] sm:$0xf]
      %v216 = vld [vmem:[%s187 + $0x44] sm:$0xf]
      %v217 = vld [vmem:[%s187 + $0x48] sm:$0xf]
      %v218 = vld [vmem:[%s187 + $0x4c] sm:$0xf]
      %v219 = vld [vmem:[%s187 + $0x50] sm:$0xf]
      %v220 = vld [vmem:[%s187 + $0x54] sm:$0xf]
      %v221 = vld [vmem:[%s187 + $0x58] sm:$0xf]
      %v222 = vld [vmem:[%s187 + $0x5c] sm:$0xf]
      %v223 = vld [vmem:[%s187 + $0x60] sm:$0xf]
      %v224 = vld [vmem:[%s187 + $0x64] sm:$0xf]
      %v225 = vld [vmem:[%s187 + $0x68] sm:$0xf]
      %v226 = vld [vmem:[%s187 + $0x6c] sm:$0xf]
      %v227 = vld [vmem:[%s187 + $0x70] sm:$0xf]
      %v228 = vld [vmem:[%s187 + $0x74] sm:$0xf]
      %v229 = vld [vmem:[%s187 + $0x78] sm:$0xf]
      %v230 = vld [vmem:[%s187 + $0x7c] sm:$0xf]
      %v231 = vunpack.c.l.bf16 %v199
      %v232 = vunpack.c.l.bf16 %v200
      %v233 = vunpack.c.l.bf16 %v201
      %v234 = vunpack.c.l.bf16 %v202
      %v235 = vunpack.c.l.bf16 %v203
      %v236 = vunpack.c.l.bf16 %v204
      %v237 = vunpack.c.l.bf16 %v205
      %v238 = vunpack.c.l.bf16 %v206
      %v239 = vunpack.c.l.bf16 %v207
      %v240 = vunpack.c.l.bf16 %v208
      %v241 = vunpack.c.l.bf16 %v209
      %v242 = vunpack.c.l.bf16 %v210
      %v243 = vunpack.c.l.bf16 %v211
      %v244 = vunpack.c.l.bf16 %v212
      %v245 = vunpack.c.l.bf16 %v213
      %v246 = vunpack.c.l.bf16 %v214
      %v247 = vunpack.c.l.bf16 %v215
      %v248 = vunpack.c.l.bf16 %v216
      %v249 = vunpack.c.l.bf16 %v217
      %v250 = vunpack.c.l.bf16 %v218
      %v251 = vunpack.c.l.bf16 %v219
      %v252 = vunpack.c.l.bf16 %v220
      %v253 = vunpack.c.l.bf16 %v221
      %v254 = vunpack.c.l.bf16 %v222
      %v255 = vunpack.c.l.bf16 %v223
      %v256 = vunpack.c.l.bf16 %v224
      %v257 = vunpack.c.l.bf16 %v225
      %v258 = vunpack.c.l.bf16 %v226
      %v259 = vunpack.c.l.bf16 %v227
      %v260 = vunpack.c.l.bf16 %v228
      %v261 = vunpack.c.l.bf16 %v229
      %v262 = vunpack.c.l.bf16 %v230
      %v263 = vld [vmem:[%s190] sm:$0x1]
      %v265 = vperm.slane %v263, 0
      %v267 = vmul.f32 %v231, %v265
      %v268 = vmul.f32 %v232, %v265
      %v269 = vmul.f32 %v233, %v265
      %v270 = vmul.f32 %v234, %v265
      %v271 = vmul.f32 %v235, %v265
      %v272 = vmul.f32 %v236, %v265
      %v273 = vmul.f32 %v237, %v265
      %v274 = vmul.f32 %v238, %v265
      %v275 = vmul.f32 %v239, %v265
      %v276 = vmul.f32 %v240, %v265
      %v277 = vmul.f32 %v241, %v265
      %v278 = vmul.f32 %v242, %v265
      %v279 = vmul.f32 %v243, %v265
      %v280 = vmul.f32 %v244, %v265
      %v281 = vmul.f32 %v245, %v265
      %v282 = vmul.f32 %v246, %v265
      %v283 = vmul.f32 %v247, %v265
      %v284 = vmul.f32 %v248, %v265
      %v285 = vmul.f32 %v249, %v265
      %v286 = vmul.f32 %v250, %v265
      %v287 = vmul.f32 %v251, %v265
      %v288 = vmul.f32 %v252, %v265
      %v289 = vmul.f32 %v253, %v265
      %v290 = vmul.f32 %v254, %v265
      %v291 = vmul.f32 %v255, %v265
      %v292 = vmul.f32 %v256, %v265
      %v293 = vmul.f32 %v257, %v265
      %v294 = vmul.f32 %v258, %v265
      %v295 = vmul.f32 %v259, %v265
      %v296 = vmul.f32 %v260, %v265
      %v297 = vmul.f32 %v261, %v265
      %v298 = vmul.f32 %v262, %v265
      %v299 = vld [vmem:[%s193] sm:$0x1]
      %v301 = vperm.slane %v299, 0
      %v303 = vadd.f32 %v267, %v301
      %v304 = vadd.f32 %v268, %v301
      %v305 = vadd.f32 %v269, %v301
      %v306 = vadd.f32 %v270, %v301
      %v307 = vadd.f32 %v271, %v301
      %v308 = vadd.f32 %v272, %v301
      %v309 = vadd.f32 %v273, %v301
      %v310 = vadd.f32 %v274, %v301
      %v311 = vadd.f32 %v275, %v301
      %v312 = vadd.f32 %v276, %v301
      %v313 = vadd.f32 %v277, %v301
      %v314 = vadd.f32 %v278, %v301
      %v315 = vadd.f32 %v279, %v301
      %v316 = vadd.f32 %v280, %v301
      %v317 = vadd.f32 %v281, %v301
      %v318 = vadd.f32 %v282, %v301
      %v319 = vadd.f32 %v283, %v301
      %v320 = vadd.f32 %v284, %v301
      %v321 = vadd.f32 %v285, %v301
      %v322 = vadd.f32 %v286, %v301
      %v323 = vadd.f32 %v287, %v301
      %v324 = vadd.f32 %v288, %v301
      %v325 = vadd.f32 %v289, %v301
      %v326 = vadd.f32 %v290, %v301
      %v327 = vadd.f32 %v291, %v301
      %v328 = vadd.f32 %v292, %v301
      %v329 = vadd.f32 %v293, %v301
      %v330 = vadd.f32 %v294, %v301
      %v331 = vadd.f32 %v295, %v301
      %v332 = vadd.f32 %v296, %v301
      %v333 = vadd.f32 %v297, %v301
      %v334 = vadd.f32 %v298, %v301
      %v335 = vmul.f32 %v303, 0.01
      %v336 = vmul.f32 %v304, 0.01
      %v337 = vmul.f32 %v305, 0.01
      %v338 = vmul.f32 %v306, 0.01
      %v339 = vmul.f32 %v307, 0.01
      %v340 = vmul.f32 %v308, 0.01
      %v341 = vmul.f32 %v309, 0.01
      %v342 = vmul.f32 %v310, 0.01
      %v343 = vmul.f32 %v311, 0.01
      %v344 = vmul.f32 %v312, 0.01
      %v345 = vmul.f32 %v313, 0.01
      %v346 = vmul.f32 %v314, 0.01
      %v347 = vmul.f32 %v315, 0.01
      %v348 = vmul.f32 %v316, 0.01
      %v349 = vmul.f32 %v317, 0.01
      %v350 = vmul.f32 %v318, 0.01
      %v351 = vmul.f32 %v319, 0.01
      %v352 = vmul.f32 %v320, 0.01
      %v353 = vmul.f32 %v321, 0.01
      %v354 = vmul.f32 %v322, 0.01
      %v355 = vmul.f32 %v323, 0.01
      %v356 = vmul.f32 %v324, 0.01
      %v357 = vmul.f32 %v325, 0.01
      %v358 = vmul.f32 %v326, 0.01
      %v359 = vmul.f32 %v327, 0.01
      %v360 = vmul.f32 %v328, 0.01
      %v361 = vmul.f32 %v329, 0.01
      %v362 = vmul.f32 %v330, 0.01
      %v363 = vmul.f32 %v331, 0.01
      %v364 = vmul.f32 %v332, 0.01
      %v365 = vmul.f32 %v333, 0.01
      %v366 = vmul.f32 %v334, 0.01
      %v367 = vmax.f32 %v303, %v335
      %v368 = vmax.f32 %v304, %v336
      %v369 = vmax.f32 %v305, %v337
      %v370 = vmax.f32 %v306, %v338
      %v371 = vmax.f32 %v307, %v339
      %v372 = vmax.f32 %v308, %v340
      %v373 = vmax.f32 %v309, %v341
      %v374 = vmax.f32 %v310, %v342
      %v375 = vmax.f32 %v311, %v343
      %v376 = vmax.f32 %v312, %v344
      %v377 = vmax.f32 %v313, %v345
      %v378 = vmax.f32 %v314, %v346
      %v379 = vmax.f32 %v315, %v347
      %v380 = vmax.f32 %v316, %v348
      %v381 = vmax.f32 %v317, %v349
      %v382 = vmax.f32 %v318, %v350
      %v383 = vmax.f32 %v319, %v351
      %v384 = vmax.f32 %v320, %v352
      %v385 = vmax.f32 %v321, %v353
      %v386 = vmax.f32 %v322, %v354
      %v387 = vmax.f32 %v323, %v355
      %v388 = vmax.f32 %v324, %v356
      %v389 = vmax.f32 %v325, %v357
      %v390 = vmax.f32 %v326, %v358
      %v391 = vmax.f32 %v327, %v359
      %v392 = vmax.f32 %v328, %v360
      %v393 = vmax.f32 %v329, %v361
      %v394 = vmax.f32 %v330, %v362
      %v395 = vmax.f32 %v331, %v363
      %v396 = vmax.f32 %v332, %v364
      %v397 = vmax.f32 %v333, %v365
      %v398 = vmax.f32 %v334, %v366
      %v399 = vpack.c.bf16 %v367, %v367
      %v400 = vpack.c.bf16 %v368, %v368
      %v401 = vpack.c.bf16 %v369, %v369
      %v402 = vpack.c.bf16 %v370, %v370
      %v403 = vpack.c.bf16 %v371, %v371
      %v404 = vpack.c.bf16 %v372, %v372
      %v405 = vpack.c.bf16 %v373, %v373
      %v406 = vpack.c.bf16 %v374, %v374
      %v407 = vpack.c.bf16 %v375, %v375
      %v408 = vpack.c.bf16 %v376, %v376
      %v409 = vpack.c.bf16 %v377, %v377
      %v410 = vpack.c.bf16 %v378, %v378
      %v411 = vpack.c.bf16 %v379, %v379
      %v412 = vpack.c.bf16 %v380, %v380
      %v413 = vpack.c.bf16 %v381, %v381
      %v414 = vpack.c.bf16 %v382, %v382
      %v415 = vpack.c.bf16 %v383, %v383
      %v416 = vpack.c.bf16 %v384, %v384
      %v417 = vpack.c.bf16 %v385, %v385
      %v418 = vpack.c.bf16 %v386, %v386
      %v419 = vpack.c.bf16 %v387, %v387
      %v420 = vpack.c.bf16 %v388, %v388
      %v421 = vpack.c.bf16 %v389, %v389
      %v422 = vpack.c.bf16 %v390, %v390
      %v423 = vpack.c.bf16 %v391, %v391
      %v424 = vpack.c.bf16 %v392, %v392
      %v425 = vpack.c.bf16 %v393, %v393
      %v426 = vpack.c.bf16 %v394, %v394
      %v427 = vpack.c.bf16 %v395, %v395
      %v428 = vpack.c.bf16 %v396, %v396
      %v429 = vpack.c.bf16 %v397, %v397
      %v430 = vpack.c.bf16 %v398, %v398
      %431 = vst [vmem:[%s198] sm:$0xf] %v399
      %432 = vst [vmem:[%s198 + $0x4] sm:$0xf] %v400
      %433 = vst [vmem:[%s198 + $0x8] sm:$0xf] %v401
      %434 = vst [vmem:[%s198 + $0xc] sm:$0xf] %v402
      %435 = vst [vmem:[%s198 + $0x10] sm:$0xf] %v403
      %436 = vst [vmem:[%s198 + $0x14] sm:$0xf] %v404
      %437 = vst [vmem:[%s198 + $0x18] sm:$0xf] %v405
      %438 = vst [vmem:[%s198 + $0x1c] sm:$0xf] %v406
      %439 = vst [vmem:[%s198 + $0x20] sm:$0xf] %v407
      %440 = vst [vmem:[%s198 + $0x24] sm:$0xf] %v408
      %441 = vst [vmem:[%s198 + $0x28] sm:$0xf] %v409
      %442 = vst [vmem:[%s198 + $0x2c] sm:$0xf] %v410
      %443 = vst [vmem:[%s198 + $0x30] sm:$0xf] %v411
      %444 = vst [vmem:[%s198 + $0x34] sm:$0xf] %v412
      %445 = vst [vmem:[%s198 + $0x38] sm:$0xf] %v413
      %446 = vst [vmem:[%s198 + $0x3c] sm:$0xf] %v414
      %447 = vst [vmem:[%s198 + $0x40] sm:$0xf] %v415
      %448 = vst [vmem:[%s198 + $0x44] sm:$0xf] %v416
      %449 = vst [vmem:[%s198 + $0x48] sm:$0xf] %v417
      %450 = vst [vmem:[%s198 + $0x4c] sm:$0xf] %v418
      %451 = vst [vmem:[%s198 + $0x50] sm:$0xf] %v419
      %452 = vst [vmem:[%s198 + $0x54] sm:$0xf] %v420
      %453 = vst [vmem:[%s198 + $0x58] sm:$0xf] %v421
      %454 = vst [vmem:[%s198 + $0x5c] sm:$0xf] %v422
      %455 = vst [vmem:[%s198 + $0x60] sm:$0xf] %v423
      %456 = vst [vmem:[%s198 + $0x64] sm:$0xf] %v424
      %457 = vst [vmem:[%s198 + $0x68] sm:$0xf] %v425
      %458 = vst [vmem:[%s198 + $0x6c] sm:$0xf] %v426
      %459 = vst [vmem:[%s198 + $0x70] sm:$0xf] %v427
      %460 = vst [vmem:[%s198 + $0x74] sm:$0xf] %v428
      %461 = vst [vmem:[%s198 + $0x78] sm:$0xf] %v429
      %462 = vst [vmem:[%s198 + $0x7c] sm:$0xf] %v430
      %p463 = scmp.lt.s32.totalorder %s14, 1
      %s464 = scalar_select %p463, %s14, 1
      %s465 = smul.addr %s464, 32
      %s466 = smul.addr %s465, 4
      %s467 = scalar_lea.vmem %s3, %s466
      // Predicated region
      $region33: #{deconv_block.3} parent=31 // pred_check
        %p468 = pneg %p110
      $region34: #{deconv_block.3} parent=31 // pred_check_branch
        %470 = sbr.rel (%p468) target = $region36
      $region35: #{deconv_block.3} parent=31 // pred_region
        _
      $region36: #{deconv_block.3} parent=31 // pred_fallthru
        _
    $region32: #{deconv_block.3} parent=5 // pred_fallthru
      _
    %p471 = scmp.le.s32.totalorder 2, %s9
    // Predicated region
    $region37: #{deconv_block.3} parent=5 // pred_check
      %p472 = pneg %p471
    $region38: #{deconv_block.3} parent=5 // pred_check_branch
      %474 = sbr.rel (%p472) target = $region40
    $region39: #{deconv_block.3} parent=5 // pred_region
      %s475 = ssub.s32 %s9, 2
      // Predicated region
      $region41: #{deconv_block.3} parent=39 // pred_check
        %p476 = pneg %p116
      $region42: #{deconv_block.3} parent=39 // pred_check_branch
        %478 = sbr.rel (%p476) target = $region44
      $region43: #{deconv_block.3} parent=39 // pred_region
        %p479 = scmp.lt.s32.totalorder %s15, 1
        %s480 = scalar_select %p479, %s15, 1
        %s481 = smul.addr %s480, 32
        %s482 = smul.addr %s481, 4
        %s483 = scalar_lea.vmem %s3, %s482
      $region44: #{deconv_block.3} parent=39 // pred_fallthru
        _
    $region40: #{deconv_block.3} parent=5 // pred_fallthru
      _
  $region6: #{deconv_block.3} parent=0 // loop_footer
    %s13 = sadd.s32 1, %s9
  $region7: #{deconv_block.3} parent=0 // loop_footer_branch
    %8 = sbr.rel target = $region3
  $region8: #{deconv_block.3} parent=0 // loop_exit
    _

// kernel: deconv_block.2
$region0: #{deconv_block.2}
  #allocation0 [shape = 'u32[]', space=smem, size = 0x4, offset = 0x4, fixed_abs, tag = 'smem constant byte address 0x4 - core index']
  #allocation1 [shape = 'u32[72,128]{1,0:T(1,128)}', space=vmem, size = 0x9000, scoped, tag = 'internal scratch']
  %s0 = inlined_call_operand.vmem [shape: bf16[2,17,17,8], index: 0, kind: input, shape index: {}]
  %s1 = inlined_call_operand.vmem [shape: bf16[4,8,128], index: 1, kind: input, shape index: {}]
  %s2 = inlined_call_operand.vmem [shape: bf16[2,256,128], index: 2, kind: output, shape index: {0}]
  %s3 = inlined_call_operand.vmem [shape: f32[2,1,128], index: 3, kind: output, shape index: {1}]
  %s4 = inlined_call_operand.vmem [shape: f32[2,1,128], index: 4, kind: output, shape index: {2}]
  %5 = xla_tuple %s2, %s3, %s4
  %s6 = sld [smem:[#allocation0]]
  $region57: #{deconv_block.2} parent=0
    _
  %s8 = ssub.s32 1, %s6
  %s9 = scalar_select 0, %s8, %s6
  loop: start=0, step=1, limit=4
  $region2: #{deconv_block.2} parent=0 // loop_pre_header
    _
  $region3: #{deconv_block.2} parent=0 // loop_header
    %s11 = sphi 0, %s15
    %p12 = scmp.ge.s32.totalorder %s11, 4
    %s21 = sphi 0, %s23
    %s24 = sphi 0, %s21
    %s25 = sphi 0, %s24
    %s41 = sphi 0, %s25
    %s45 = sphi 0, %s45
    %s47 = sphi 0, %s45
    %s48 = sphi 0, %s47
    %s62 = sphi 0, %s48
    %s68 = sphi 0, %s70
    %s71 = sphi 0, %s68
    %s72 = sphi 0, %s71
    %s88 = sphi 0, %s72
    %s94 = sphi 0, %s96
    %s97 = sphi 0, %s94
    %s98 = sphi 0, %s97
    %s114 = sphi 0, %s98
    %s120 = sphi 0, %s122
    %s123 = sphi 0, %s120
    %s124 = sphi 0, %s123
    %s140 = sphi 0, %s124
  $region4: #{deconv_block.2} parent=0 // loop_header_branch
    %14 = sbr.rel (%p12) target = $region8
  $region5: #{deconv_block.2} parent=0 // loop_body
    %s16 = ssub.s32 %s11, 1
    %s17 = ssub.s32 %s11, 2
    %s18 = sadd.s32 %s11, 1
    %s19 = ssub.s32 %s11, %s18
    %p20 = scmp.eq.s32.totalorder %s19, 0
    %s22 = sadd.s32 %s21, 1
    %s23 = scalar_select %p20, %s21, %s22
    %p26 = pneg %p20
    %p27 = scmp.eq.s32.totalorder %s11, 1
    %p28 = por %p26, %p27
    %p29 = scmp.ne.s32.totalorder %s21, %s24
    %p30 = scmp.eq.s32.totalorder %s11, 0
    %p31 = por %p29, %p30
    %p32 = scmp.ne.s32.totalorder %s21, %s24
    %p33 = scmp.eq.s32.totalorder %s16, 1
    %p34 = por %p32, %p33
    %p35 = scmp.ne.s32.totalorder %s24, %s25
    %p36 = scmp.eq.s32.totalorder %s16, 0
    %p37 = por %p35, %p36
    %p38 = scmp.ne.s32.totalorder %s24, %s25
    %p39 = scmp.eq.s32.totalorder %s17, 1
    %p40 = por %p38, %p39
    %p42 = scmp.ne.s32.totalorder %s25, %s41
    %p43 = scmp.eq.s32.totalorder %s17, 0
    %p44 = por %p42, %p43
    %s46 = sadd.s32 %s45, 1
    %p49 = scmp.eq.s32.totalorder %s11, 1
    %p50 = scmp.ne.s32.totalorder %s45, %s47
    %p51 = scmp.eq.s32.totalorder %s11, 0
    %p52 = por %p50, %p51
    %p53 = scmp.ne.s32.totalorder %s45, %s47
    %p54 = scmp.eq.s32.totalorder %s16, 1
    %p55 = por %p53, %p54
    %p56 = scmp.ne.s32.totalorder %s47, %s48
    %p57 = scmp.eq.s32.totalorder %s16, 0
    %p58 = por %p56, %p57
    %p59 = scmp.ne.s32.totalorder %s47, %s48
    %p60 = scmp.eq.s32.totalorder %s17, 1
    %p61 = por %p59, %p60
    %p63 = scmp.ne.s32.totalorder %s48, %s62
    %p64 = scmp.eq.s32.totalorder %s17, 0
    %p65 = por %p63, %p64
    %s66 = ssub.s32 %s11, %s18
    %p67 = scmp.eq.s32.totalorder %s66, 0
    %s69 = sadd.s32 %s68, 1
    %s70 = scalar_select %p67, %s68, %s69
    %p73 = pneg %p67
    %p74 = scmp.eq.s32.totalorder %s11, 1
    %p75 = por %p73, %p74
    %p76 = scmp.ne.s32.totalorder %s68, %s71
    %p77 = scmp.eq.s32.totalorder %s11, 0
    %p78 = por %p76, %p77
    %p79 = scmp.ne.s32.totalorder %s68, %s71
    %p80 = scmp.eq.s32.totalorder %s16, 1
    %p81 = por %p79, %p80
    %p82 = scmp.ne.s32.totalorder %s71, %s72
    %p83 = scmp.eq.s32.totalorder %s16, 0
    %p84 = por %p82, %p83
    %p85 = scmp.ne.s32.totalorder %s71, %s72
    %p86 = scmp.eq.s32.totalorder %s17, 1
    %p87 = por %p85, %p86
    %p89 = scmp.ne.s32.totalorder %s72, %s88
    %p90 = scmp.eq.s32.totalorder %s17, 0
    %p91 = por %p89, %p90
    %s92 = ssub.s32 %s11, %s18
    %p93 = scmp.eq.s32.totalorder %s92, 0
    %s95 = sadd.s32 %s94, 1
    %s96 = scalar_select %p93, %s94, %s95
    %p99 = pneg %p93
    %p100 = scmp.eq.s32.totalorder %s11, 1
    %p101 = por %p99, %p100
    %p102 = scmp.ne.s32.totalorder %s94, %s97
    %p103 = scmp.eq.s32.totalorder %s11, 0
    %p104 = por %p102, %p103
    %p105 = scmp.ne.s32.totalorder %s94, %s97
    %p106 = scmp.eq.s32.totalorder %s16, 1
    %p107 = por %p105, %p106
    %p108 = scmp.ne.s32.totalorder %s97, %s98
    %p109 = scmp.eq.s32.totalorder %s16, 0
    %p110 = por %p108, %p109
    %p111 = scmp.ne.s32.totalorder %s97, %s98
    %p112 = scmp.eq.s32.totalorder %s17, 1
    %p113 = por %p111, %p112
    %p115 = scmp.ne.s32.totalorder %s98, %s114
    %p116 = scmp.eq.s32.totalorder %s17, 0
    %p117 = por %p115, %p116
    %s118 = ssub.s32 %s11, %s18
    %p119 = scmp.eq.s32.totalorder %s118, 0
    %s121 = sadd.s32 %s120, 1
    %s122 = scalar_select %p119, %s120, %s121
    %p125 = pneg %p119
    %p126 = scmp.eq.s32.totalorder %s11, 1
    %p127 = por %p125, %p126
    %p128 = scmp.ne.s32.totalorder %s120, %s123
    %p129 = scmp.eq.s32.totalorder %s11, 0
    %p130 = por %p128, %p129
    %p131 = scmp.ne.s32.totalorder %s120, %s123
    %p132 = scmp.eq.s32.totalorder %s16, 1
    %p133 = por %p131, %p132
    %p134 = scmp.ne.s32.totalorder %s123, %s124
    %p135 = scmp.eq.s32.totalorder %s16, 0
    %p136 = por %p134, %p135
    %p137 = scmp.ne.s32.totalorder %s123, %s124
    %p138 = scmp.eq.s32.totalorder %s17, 1
    %p139 = por %p137, %p138
    %p141 = scmp.ne.s32.totalorder %s124, %s140
    %p142 = scmp.eq.s32.totalorder %s17, 0
    %p143 = por %p141, %p142
    %p144 = scmp.le.s32.totalorder 1, %s11
    %p145 = scmp.lt.s32.totalorder %s11, 3
    %p146 = pnand %p144, %p145
    %p147 = pneg %p146
    // Predicated region
    $region9: #{deconv_block.2} parent=5 // pred_check
      _
    $region10: #{deconv_block.2} parent=5 // pred_check_branch
      %149 = sbr.rel (%p146) target = $region12
    $region11: #{deconv_block.2} parent=5 // pred_region
      %s150 = ssub.s32 %s11, 1
      // Predicated region
      $region13: #{deconv_block.2} parent=11 // pred_check
        %p151 = pneg %p58
      $region14: #{deconv_block.2} parent=11 // pred_check_branch
        %153 = sbr.rel (%p151) target = $region16
      $region15: #{deconv_block.2} parent=11 // pred_region
        _
      $region16: #{deconv_block.2} parent=11 // pred_fallthru
        _
    $region12: #{deconv_block.2} parent=5 // pred_fallthru
      _
    %p154 = scmp.lt.s32.totalorder %s11, 2
    // Predicated region
    $region17: #{deconv_block.2} parent=5 // pred_check
      %p155 = pneg %p154
    $region18: #{deconv_block.2} parent=5 // pred_check_branch
      %157 = sbr.rel (%p155) target = $region20
    $region19: #{deconv_block.2} parent=5 // pred_region
      // Predicated region
      $region21: #{deconv_block.2} parent=19 // pred_check
        %p158 = pneg %p31
      $region22: #{deconv_block.2} parent=19 // pred_check_branch
        %160 = sbr.rel (%p158) target = $region24
      $region23: #{deconv_block.2} parent=19 // pred_region
        %p161 = scmp.lt.s32.totalorder %s11, 1
        %s162 = scalar_select %p161, %s11, 1
        %s163 = smul.addr %s162, 51
        %s164 = smul.addr %s163, 4
        %s165 = scalar_lea.vmem %s0, %s164
      $region24: #{deconv_block.2} parent=19 // pred_fallthru
        _
    $region20: #{deconv_block.2} parent=5 // pred_fallthru
      _
    %p166 = scmp.le.s32.totalorder 1, %s11
    %p167 = scmp.lt.s32.totalorder %s11, 3
    %p168 = pnand %p166, %p167
    %p169 = pneg %p168
    // Predicated region
    $region25: #{deconv_block.2} parent=5 // pred_check
      _
    $region26: #{deconv_block.2} parent=5 // pred_check_branch
      %171 = sbr.rel (%p168) target = $region28
    $region27: #{deconv_block.2} parent=5 // pred_region
      %s172 = ssub.s32 %s11, 1
      %p173 = scmp.lt.s32.totalorder %s16, 1
      %s174 = scalar_select %p173, %s16, 1
      %s175 = smul.addr %s174, 51
      %s176 = smul.addr %s175, 4
      %s177 = scalar_lea.vmem %s0, %s176
      %p178 = pneg %p37
      %p179 = pneg %p34
      %p180 = pneg %p58
      %p181 = pneg %p55
      %p182 = pneg %p84
      %p183 = pneg %p81
      %p184 = scmp.lt.s32.totalorder %s16, 1
      %s185 = scalar_select %p184, %s16, 1
      %s186 = smul.addr %s185, 32
      %s187 = smul.addr %s186, 4
      %s188 = scalar_lea.vmem %s2, %s187
      %p189 = pneg %p110
      %p190 = pneg %p107
      %p191 = scmp.lt.s32.totalorder %s16, 1
      %s192 = scalar_select %p191, %s16, 1
      %s193 = scalar_lea.vmem %s3, %s192
      %p194 = pneg %p136
      %p195 = pneg %p133
      %p196 = scmp.lt.s32.totalorder %s16, 1
      %s197 = scalar_select %p196, %s16, 1
      %s198 = scalar_lea.vmem %s4, %s197
      %p199 = scmp.lt.s32.totalorder %s16, 1
      %s200 = scalar_select %p199, %s16, 1
      %s201 = smul.addr %s200, 51
      %s202 = smul.addr %s201, 4
      %s203 = scalar_lea.vmem %s0, %s202
      %p204 = scmp.lt.s32.totalorder %s16, 1
      %s205 = scalar_select %p204, %s16, 1
      %s206 = smul.addr %s205, 32
      %s207 = smul.addr %s206, 4
      %s208 = scalar_lea.vmem %s2, %s207
      %p209 = scmp.lt.s32.totalorder %s16, 1
      %s210 = scalar_select %p209, %s16, 1
      %s211 = scalar_lea.vmem %s3, %s210
      %p212 = scmp.lt.s32.totalorder %s16, 1
      %s213 = scalar_select %p212, %s16, 1
      %s214 = scalar_lea.vmem %s4, %s213
      %v216 = vld [vmem:[%s203] sm:$0xf]
      %v217 = vld [vmem:[%s203 + $0x4] sm:$0xf]
      %v218 = vld [vmem:[%s203 + $0xc] sm:$0xf]
      %v219 = vld [vmem:[%s203 + $0x10] sm:$0xf]
      %v220 = vld [vmem:[%s203 + $0x18] sm:$0xf]
      %v221 = vld [vmem:[%s203 + $0x1c] sm:$0xf]
      %v222 = vld [vmem:[%s203 + $0x24] sm:$0xf]
      %v223 = vld [vmem:[%s203 + $0x28] sm:$0xf]
      %v224 = vld [vmem:[%s203 + $0x30] sm:$0xf]
      %v225 = vld [vmem:[%s203 + $0x34] sm:$0xf]
      %v226 = vld [vmem:[%s203 + $0x3c] sm:$0xf]
      %v227 = vld [vmem:[%s203 + $0x40] sm:$0xf]
      %v228 = vld [vmem:[%s203 + $0x48] sm:$0xf]
      %v229 = vld [vmem:[%s203 + $0x4c] sm:$0xf]
      %v230 = vld [vmem:[%s203 + $0x54] sm:$0xf]
      %v231 = vld [vmem:[%s203 + $0x58] sm:$0xf]
      %v232 = vld [vmem:[%s203 + $0x60] sm:$0xf]
      %v233 = vld [vmem:[%s203 + $0x64] sm:$0xf]
      %v234 = vld [vmem:[%s203 + $0x6c] sm:$0xf]
      %v235 = vld [vmem:[%s203 + $0x70] sm:$0xf]
      %v236 = vld [vmem:[%s203 + $0x78] sm:$0xf]
      %v237 = vld [vmem:[%s203 + $0x7c] sm:$0xf]
      %v238 = vld [vmem:[%s203 + $0x84] sm:$0xf]
      %v239 = vld [vmem:[%s203 + $0x88] sm:$0xf]
      %v240 = vld [vmem:[%s203 + $0x90] sm:$0xf]
      %v241 = vld [vmem:[%s203 + $0x94] sm:$0xf]
      %v242 = vld [vmem:[%s203 + $0x9c] sm:$0xf]
      %v243 = vld [vmem:[%s203 + $0xa0] sm:$0xf]
      %v244 = vld [vmem:[%s203 + $0xa8] sm:$0xf]
      %v245 = vld [vmem:[%s203 + $0xac] sm:$0xf]
      %v246 = vld [vmem:[%s203 + $0xb4] sm:$0xf]
      %v247 = vld [vmem:[%s203 + $0xb8] sm:$0xf]
      %v248 = vld [vmem:[%s1] sm:$0xf]
      %v249 = vld [vmem:[%s203 + $0x8] sm:$0x1]
      %v250 = vld [vmem:[%s203 + $0x14] sm:$0x1]
      %v251 = vld [vmem:[%s203 + $0x20] sm:$0x1]
      %v252 = vld [vmem:[%s203 + $0x2c] sm:$0x1]
      %v253 = vld [vmem:[%s203 + $0x38] sm:$0x1]
      %v254 = vld [vmem:[%s203 + $0x44] sm:$0x1]
      %v255 = vld [vmem:[%s203 + $0x50] sm:$0x1]
      %v256 = vld [vmem:[%s203 + $0x5c] sm:$0x1]
      %v257 = vld [vmem:[%s203 + $0x68] sm:$0x1]
      %v258 = vld [vmem:[%s203 + $0x74] sm:$0x1]
      %v259 = vld [vmem:[%s203 + $0x80] sm:$0x1]
      %v260 = vld [vmem:[%s203 + $0x8c] sm:$0x1]
      %v261 = vld [vmem:[%s203 + $0x98] sm:$0x1]
      %v262 = vld [vmem:[%s203 + $0xa4] sm:$0x1]
      %v263 = vld [vmem:[%s203 + $0xb0] sm:$0x1]
      %v264 = vld [vmem:[%s203 + $0xbc] sm:$0x1]
      %vm265 = vsmask.f32 3328
      %vm266 = vsmask.f32 7440
      %vm267 = vmor %vm265, %vm266
      %v269 = vshrl.u32 %v216, 16
      %v271 = vrot.slane %v269, 4
      %v272 = vshll.u32 %v216, 16
      %v274 = vrot.slane %v272, 5
      %v275 = vor.u32 %v271, %v274
      %v276 = vrot.slane %v275, 4
      %v278 = vshll.u32 %v217, 16
      %v280 = vrot.slane %v278, 5
      %v281 = vsel %vm267, %v276, %v280
      %v282 = vshrl.u32 %v217, 16
      %v284 = vrot.slane %v282, 4
      %v285 = vor.u32 %v284, %v280
      %v286 = vrot.slane %v285, 4
      %v288 = vshll.u32 %v249, 16
      %v290 = vrot.slane %v288, 5
      %v291 = vsel %vm267, %v286, %v290
      %v293 = vshrl.u32 %v218, 16
      %v295 = vrot.slane %v293, 4
      %v296 = vshll.u32 %v218, 16
      %v298 = vrot.slane %v296, 5
      %v299 = vor.u32 %v295, %v298
      %v300 = vrot.slane %v299, 4
      %v302 = vshll.u32 %v219, 16
      %v304 = vrot.slane %v302, 5
      %v305 = vsel %vm267, %v300, %v304
      %v306 = vshrl.u32 %v219, 16
      %v308 = vrot.slane %v306, 4
      %v309 = vor.u32 %v308, %v304
      %v310 = vrot.slane %v309, 4
      %v312 = vshll.u32 %v250, 16
      %v314 = vrot.slane %v312, 5
      %v315 = vsel %vm267, %v310, %v314
      %v317 = vshrl.u32 %v220, 16
      %v319 = vrot.slane %v317, 4
      %v320 = vshll.u32 %v220, 16
      %v322 = vrot.slane %v320, 5
      %v323 = vor.u32 %v319, %v322
      %v324 = vrot.slane %v323, 4
      %v326 = vshll.u32 %v221, 16
      %v328 = vrot.slane %v326, 5
      %v329 = vsel %vm267, %v324, %v328
      %v330 = vshrl.u32 %v221, 16
      %v332 = vrot.slane %v330, 4
      %v333 = vor.u32 %v332, %v328
      %v334 = vrot.slane %v333, 4
      %v336 = vshll.u32 %v251, 16
      %v338 = vrot.slane %v336, 5
      %v339 = vsel %vm267, %v334, %v338
      %v341 = vshrl.u32 %v222, 16
      %v343 = vrot.slane %v341, 4
      %v344 = vshll.u32 %v222, 16
      %v346 = vrot.slane %v344, 5
      %v347 = vor.u32 %v343, %v346
      %v348 = vrot.slane %v347, 4
      %v350 = vshll.u32 %v223, 16
      %v352 = vrot.slane %v350, 5
      %v353 = vsel %vm267, %v348, %v352
      %v354 = vshrl.u32 %v223, 16
      %v356 = vrot.slane %v354, 4
      %v357 = vor.u32 %v356, %v352
      %v358 = vrot.slane %v357, 4
      %v360 = vshll.u32 %v252, 16
      %v362 = vrot.slane %v360, 5
      %v363 = vsel %vm267, %v358, %v362
      %v365 = vshrl.u32 %v224, 16
      %v367 = vrot.slane %v365, 4
      %v368 = vshll.u32 %v224, 16
      %v370 = vrot.slane %v368, 5
      %v371 = vor.u32 %v367, %v370
      %v372 = vrot.slane %v371, 4
      %v374 = vshll.u32 %v225, 16
      %v376 = vrot.slane %v374, 5
      %v377 = vsel %vm267, %v372, %v376
      %v378 = vshrl.u32 %v225, 16
      %v380 = vrot.slane %v378, 4
      %v381 = vor.u32 %v380, %v376
      %v382 = vrot.slane %v381, 4
      %v384 = vshll.u32 %v253, 16
      %v386 = vrot.slane %v384, 5
      %v387 = vsel %vm267, %v382, %v386
      %v389 = vshrl.u32 %v226, 16
      %v391 = vrot.slane %v389, 4
      %v392 = vshll.u32 %v226, 16
      %v394 = vrot.slane %v392, 5
      %v395 = vor.u32 %v391, %v394
      %v396 = vrot.slane %v395, 4
      %v398 = vshll.u32 %v227, 16
      %v400 = vrot.slane %v398, 5
      %v401 = vsel %vm267, %v396, %v400
      %v402 = vshrl.u32 %v227, 16
      %v404 = vrot.slane %v402, 4
      %v405 = vor.u32 %v404, %v400
      %v406 = vrot.slane %v405, 4
      %v408 = vshll.u32 %v254, 16
      %v410 = vrot.slane %v408, 5
      %v411 = vsel %vm267, %v406, %v410
      %v413 = vshrl.u32 %v228, 16
      %v415 = vrot.slane %v413, 4
      %v416 = vshll.u32 %v228, 16
      %v418 = vrot.slane %v416, 5
      %v419 = vor.u32 %v415, %v418
      %v420 = vrot.slane %v419, 4
      %v422 = vshll.u32 %v229, 16
      %v424 = vrot.slane %v422, 5
      %v425 = vsel %vm267, %v420, %v424
      %v426 = vshrl.u32 %v229, 16
      %v428 = vrot.slane %v426, 4
      %v429 = vor.u32 %v428, %v424
      %v430 = vrot.slane %v429, 4
      %v432 = vshll.u32 %v255, 16
      %v434 = vrot.slane %v432, 5
      %v435 = vsel %vm267, %v430, %v434
      %v437 = vshrl.u32 %v230, 16
      %v439 = vrot.slane %v437, 4
      %v440 = vshll.u32 %v230, 16
      %v442 = vrot.slane %v440, 5
      %v443 = vor.u32 %v439, %v442
      %v444 = vrot.slane %v443, 4
      %v446 = vshll.u32 %v231, 16
      %v448 = vrot.slane %v446, 5
      %v449 = vsel %vm267, %v444, %v448
      %v450 = vshrl.u32 %v231, 16
      %v452 = vrot.slane %v450, 4
      %v453 = vor.u32 %v452, %v448
      %v454 = vrot.slane %v453, 4
      %v456 = vshll.u32 %v256, 16
      %v458 = vrot.slane %v456, 5
      %v459 = vsel %vm267, %v454, %v458
      %v461 = vshrl.u32 %v232, 16
      %v463 = vrot.slane %v461, 4
      %v464 = vshll.u32 %v232, 16
      %v466 = vrot.slane %v464, 5
      %v467 = vor.u32 %v463, %v466
      %v468 = vrot.slane %v467, 4
      %v470 = vshll.u32 %v233, 16
      %v472 = vrot.slane %v470, 5
      %v473 = vsel %vm267, %v468, %v472
      %v474 = vshrl.u32 %v233, 16
      %v476 = vrot.slane %v474, 4
      %v477 = vor.u32 %v476, %v472
      %v478 = vrot.slane %v477, 4
      %v480 = vshll.u32 %v257, 16
      %v482 = vrot.slane %v480, 5
      %v483 = vsel %vm267, %v478, %v482
      %v485 = vshrl.u32 %v234, 16
      %v487 = vrot.slane %v485, 4
      %v488 = vshll.u32 %v234, 16
      %v490 = vrot.slane %v488, 5
      %v491 = vor.u32 %v487, %v490
      %v492 = vrot.slane %v491, 4
      %v494 = vshll.u32 %v235, 16
      %v496 = vrot.slane %v494, 5
      %v497 = vsel %vm267, %v492, %v496
      %v498 = vshrl.u32 %v235, 16
      %v500 = vrot.slane %v498, 4
      %v501 = vor.u32 %v500, %v496
      %v502 = vrot.slane %v501, 4
      %v504 = vshll.u32 %v258, 16
      %v506 = vrot.slane %v504, 5
      %v507 = vsel %vm267, %v502, %v506
      %v509 = vshrl.u32 %v236, 16
      %v511 = vrot.slane %v509, 4
      %v512 = vshll.u32 %v236, 16
      %v514 = vrot.slane %v512, 5
      %v515 = vor.u32 %v511, %v514
      %v516 = vrot.slane %v515, 4
      %v518 = vshll.u32 %v237, 16
      %v520 = vrot.slane %v518, 5
      %v521 = vsel %vm267, %v516, %v520
      %v522 = vshrl.u32 %v237, 16
      %v524 = vrot.slane %v522, 4
      %v525 = vor.u32 %v524, %v520
      %v526 = vrot.slane %v525, 4
      %v528 = vshll.u32 %v259, 16
      %v530 = vrot.slane %v528, 5
      %v531 = vsel %vm267, %v526, %v530
      %v533 = vshrl.u32 %v238, 16
      %v535 = vrot.slane %v533, 4
      %v536 = vshll.u32 %v238, 16
      %v538 = vrot.slane %v536, 5
      %v539 = vor.u32 %v535, %v538
      %v540 = vrot.slane %v539, 4
      %v542 = vshll.u32 %v239, 16
      %v544 = vrot.slane %v542, 5
      %v545 = vsel %vm267, %v540, %v544
      %v546 = vshrl.u32 %v239, 16
      %v548 = vrot.slane %v546, 4
      %v549 = vor.u32 %v548, %v544
      %v550 = vrot.slane %v549, 4
      %v552 = vshll.u32 %v260, 16
      %v554 = vrot.slane %v552, 5
      %v555 = vsel %vm267, %v550, %v554
      %v557 = vshrl.u32 %v240, 16
      %v559 = vrot.slane %v557, 4
      %v560 = vshll.u32 %v240, 16
      %v562 = vrot.slane %v560, 5
      %v563 = vor.u32 %v559, %v562
      %v564 = vrot.slane %v563, 4
      %v566 = vshll.u32 %v241, 16
      %v568 = vrot.slane %v566, 5
      %v569 = vsel %vm267, %v564, %v568
      %v570 = vshrl.u32 %v241, 16
      %v572 = vrot.slane %v570, 4
      %v573 = vor.u32 %v572, %v568
      %v574 = vrot.slane %v573, 4
      %v576 = vshll.u32 %v261, 16
      %v578 = vrot.slane %v576, 5
      %v579 = vsel %vm267, %v574, %v578
      %v581 = vshrl.u32 %v242, 16
      %v583 = vrot.slane %v581, 4
      %v584 = vshll.u32 %v242, 16
      %v586 = vrot.slane %v584, 5
      %v587 = vor.u32 %v583, %v586
      %v588 = vrot.slane %v587, 4
      %v590 = vshll.u32 %v243, 16
      %v592 = vrot.slane %v590, 5
      %v593 = vsel %vm267, %v588, %v592
      %v594 = vshrl.u32 %v243, 16
      %v596 = vrot.slane %v594, 4
      %v597 = vor.u32 %v596, %v592
      %v598 = vrot.slane %v597, 4
      %v600 = vshll.u32 %v262, 16
      %v602 = vrot.slane %v600, 5
      %v603 = vsel %vm267, %v598, %v602
      %v605 = vshrl.u32 %v244, 16
      %v607 = vrot.slane %v605, 4
      %v608 = vshll.u32 %v244, 16
      %v610 = vrot.slane %v608, 5
      %v611 = vor.u32 %v607, %v610
      %v612 = vrot.slane %v611, 4
      %v614 = vshll.u32 %v245, 16
      %v616 = vrot.slane %v614, 5
      %v617 = vsel %vm267, %v612, %v616
      %v618 = vshrl.u32 %v245, 16
      %v620 = vrot.slane %v618, 4
      %v621 = vor.u32 %v620, %v616
      %v622 = vrot.slane %v621, 4
      %v624 = vshll.u32 %v263, 16
      %v626 = vrot.slane %v624, 5
      %v627 = vsel %vm267, %v622, %v626
      %v629 = vshrl.u32 %v246, 16
      %v631 = vrot.slane %v629, 4
      %v632 = vshll.u32 %v246, 16
      %v634 = vrot.slane %v632, 5
      %v635 = vor.u32 %v631, %v634
      %v636 = vrot.slane %v635, 4
      %v638 = vshll.u32 %v247, 16
      %v640 = vrot.slane %v638, 5
      %v641 = vsel %vm267, %v636, %v640
      %v642 = vshrl.u32 %v247, 16
      %v644 = vrot.slane %v642, 4
      %v645 = vor.u32 %v644, %v640
      %v646 = vrot.slane %v645, 4
      %v648 = vshll.u32 %v264, 16
      %v650 = vrot.slane %v648, 5
      %v651 = vsel %vm267, %v646, %v650
      %s652 = scalar_lea.vmem %s1, 4
      %v653 = vld [vmem:[%s652] sm:$0xf]
      %v654 = vunpack.c.l.b16 %v281
      %v655 = vunpack.c.l.b16 %v291
      %v656 = vunpack.c.l.b16 %v305
      %v657 = vunpack.c.l.b16 %v315
      %v658 = vunpack.c.l.b16 %v329
      %v659 = vunpack.c.l.b16 %v339
      %v660 = vunpack.c.l.b16 %v353
      %v661 = vunpack.c.l.b16 %v363
      %v662 = vunpack.c.l.b16 %v377
      %v663 = vunpack.c.l.b16 %v387
      %v664 = vunpack.c.l.b16 %v401
      %v665 = vunpack.c.l.b16 %v411
      %v666 = vunpack.c.l.b16 %v425
      %v667 = vunpack.c.l.b16 %v435
      %v668 = vunpack.c.l.b16 %v449
      %v669 = vunpack.c.l.b16 %v459
      %v670 = vunpack.c.l.b16 %v473
      %v671 = vunpack.c.l.b16 %v483
      %v672 = vunpack.c.l.b16 %v497
      %v673 = vunpack.c.l.b16 %v507
      %v674 = vunpack.c.l.b16 %v521
      %v675 = vunpack.c.l.b16 %v531
      %v676 = vunpack.c.l.b16 %v545
      %v677 = vunpack.c.l.b16 %v555
      %v678 = vunpack.c.l.b16 %v569
      %v679 = vunpack.c.l.b16 %v579
      %v680 = vunpack.c.l.b16 %v593
      %v681 = vunpack.c.l.b16 %v603
      %v682 = vunpack.c.l.b16 %v617
      %v683 = vunpack.c.l.b16 %v627
      %v684 = vunpack.c.l.b16 %v641
      %v685 = vunpack.c.l.b16 %v651
      %v686 = vpack.c.b16 %v655, %v654
      %v687 = vpack.c.b16 %v657, %v656
      %v688 = vpack.c.b16 %v659, %v658
      %v689 = vpack.c.b16 %v661, %v660
      %v690 = vpack.c.b16 %v663, %v662
      %v691 = vpack.c.b16 %v665, %v664
      %v692 = vpack.c.b16 %v667, %v666
      %v693 = vpack.c.b16 %v669, %v668
      %v694 = vpack.c.b16 %v671, %v670
      %v695 = vpack.c.b16 %v673, %v672
      %v696 = vpack.c.b16 %v675, %v674
      %v697 = vpack.c.b16 %v677, %v676
      %v698 = vpack.c.b16 %v679, %v678
      %v699 = vpack.c.b16 %v681, %v680
      %v700 = vpack.c.b16 %v683, %v682
      %v701 = vpack.c.b16 %v685, %v684
      %vm702 = vcmask 64512
      %v704 = vsel %vm702, %v686, 0
      %v707 = vsel %vm702, %v687, 0
      %v710 = vsel %vm702, %v688, 0
      %v713 = vsel %vm702, %v689, 0
      %v716 = vsel %vm702, %v690, 0
      %v719 = vsel %vm702, %v691, 0
      %v722 = vsel %vm702, %v692, 0
      %v725 = vsel %vm702, %v693, 0
      %v728 = vsel %vm702, %v694, 0
      %v731 = vsel %vm702, %v695, 0
      %v734 = vsel %vm702, %v696, 0
      %v737 = vsel %vm702, %v697, 0
      %v740 = vsel %vm702, %v698, 0
      %v743 = vsel %vm702, %v699, 0
      %v746 = vsel %vm702, %v700, 0
      %v749 = vsel %vm702, %v701, 0
      %vm751 = vcmask 1043456
      %v753 = vsel %vm751, %v653, 0
      %755 = vmatpush.bf16.msra.mxu0 0
      %756 = vmatpush.bf16.msra.mxu0 0
      %757 = vmatpush.bf16.msra.mxu0 0
      %758 = vmatpush.bf16.msra.mxu0 0
      %759 = vmatpush.bf16.msra.mxu0 0
      %760 = vmatpush.bf16.msra.mxu0 0
      %761 = vmatpush.bf16.msra.mxu0 0
      %762 = vmatpush.bf16.msra.mxu0 %v753
      %763 = vmatmul.bf16.gmra.mxu0 %v704
      %v764 = vpop.f32.mrf.mxu0
      %v765 = vadd.f32 0.0, %v764
      %v766 = vpop.f32.mrf.mxu0
      %v767 = vadd.f32 0.0, %v766
      %768 = vmatmul.bf16.gmra.mxu0 %v707
      %v769 = vpop.f32.mrf.mxu0
      %v770 = vadd.f32 0.0, %v769
      %v771 = vpop.f32.mrf.mxu0
      %v772 = vadd.f32 0.0, %v771
      %773 = vmatmul.bf16.gmra.mxu0 %v710
      %v774 = vpop.f32.mrf.mxu0
      %v775 = vadd.f32 0.0, %v774
      %v776 = vpop.f32.mrf.mxu0
      %v777 = vadd.f32 0.0, %v776
      %778 = vmatmul.bf16.gmra.mxu0 %v713
      %v779 = vpop.f32.mrf.mxu0
      %v780 = vadd.f32 0.0, %v779
      %v781 = vpop.f32.mrf.mxu0
      %v782 = vadd.f32 0.0, %v781
      %783 = vmatmul.bf16.gmra.mxu0 %v716
      %v784 = vpop.f32.mrf.mxu0
      %v785 = vadd.f32 0.0, %v784
      %v786 = vpop.f32.mrf.mxu0
      %v787 = vadd.f32 0.0, %v786
      %788 = vmatmul.bf16.gmra.mxu0 %v719
      %v789 = vpop.f32.mrf.mxu0
      %v790 = vadd.f32 0.0, %v789
      %v791 = vpop.f32.mrf.mxu0
      %v792 = vadd.f32 0.0, %v791
      %793 = vmatmul.bf16.gmra.mxu0 %v722
      %v794 = vpop.f32.mrf.mxu0
      %v795 = vadd.f32 0.0, %v794
      %v796 = vpop.f32.mrf.mxu0
      %v797 = vadd.f32 0.0, %v796
      %798 = vmatmul.bf16.gmra.mxu0 %v725
      %v799 = vpop.f32.mrf.mxu0
      %v800 = vadd.f32 0.0, %v799
      %v801 = vpop.f32.mrf.mxu0
      %v802 = vadd.f32 0.0, %v801
      %803 = vmatmul.bf16.gmra.mxu0 %v728
      %v804 = vpop.f32.mrf.mxu0
      %v805 = vadd.f32 0.0, %v804
      %v806 = vpop.f32.mrf.mxu0
      %v807 = vadd.f32 0.0, %v806
      %808 = vmatmul.bf16.gmra.mxu0 %v731
      %v809 = vpop.f32.mrf.mxu0
      %v810 = vadd.f32 0.0, %v809
      %v811 = vpop.f32.mrf.mxu0
      %v812 = vadd.f32 0.0, %v811
      %813 = vmatmul.bf16.gmra.mxu0 %v734
      %v814 = vpop.f32.mrf.mxu0
      %v815 = vadd.f32 0.0, %v814
      %v816 = vpop.f32.mrf.mxu0
      %v817 = vadd.f32 0.0, %v816
      %818 = vmatmul.bf16.gmra.mxu0 %v737
      %v819 = vpop.f32.mrf.mxu0
      %v820 = vadd.f32 0.0, %v819
      %v821 = vpop.f32.mrf.mxu0
      %v822 = vadd.f32 0.0, %v821
      %823 = vmatmul.bf16.gmra.mxu0 %v740
      %v824 = vpop.f32.mrf.mxu0
      %v825 = vadd.f32 0.0, %v824
      %v826 = vpop.f32.mrf.mxu0
      %v827 = vadd.f32 0.0, %v826
      %828 = vmatmul.bf16.gmra.mxu0 %v743
      %v829 = vpop.f32.mrf.mxu0
      %v830 = vadd.f32 0.0, %v829
      %v831 = vpop.f32.mrf.mxu0
      %v832 = vadd.f32 0.0, %v831
      %833 = vmatmul.bf16.gmra.mxu0 %v746
      %v834 = vpop.f32.mrf.mxu0
      %v835 = vadd.f32 0.0, %v834
      %v836 = vpop.f32.mrf.mxu0
      %v837 = vadd.f32 0.0, %v836
      %838 = vmatmul.bf16.gmra.mxu0 %v749
      %v839 = vpop.f32.mrf.mxu0
      %v840 = vadd.f32 0.0, %v839
      %v841 = vpop.f32.mrf.mxu0
      %v842 = vadd.f32 0.0, %v841
      %843 = vdwg.mxu0
      %v876 = vunpack.c.l.b16 %v216
      %v877 = vunpack.c.l.b16 %v217
      %v878 = vunpack.c.l.b16 %v218
      %v879 = vunpack.c.l.b16 %v219
      %v880 = vunpack.c.l.b16 %v220
      %v881 = vunpack.c.l.b16 %v221
      %v882 = vunpack.c.l.b16 %v222
      %v883 = vunpack.c.l.b16 %v223
      %v884 = vunpack.c.l.b16 %v224
      %v885 = vunpack.c.l.b16 %v225
      %v886 = vunpack.c.l.b16 %v226
      %v887 = vunpack.c.l.b16 %v227
      %v888 = vunpack.c.l.b16 %v228
      %v889 = vunpack.c.l.b16 %v229
      %v890 = vunpack.c.l.b16 %v230
      %v891 = vunpack.c.l.b16 %v231
      %v892 = vunpack.c.l.b16 %v232
      %v893 = vunpack.c.l.b16 %v233
      %v894 = vunpack.c.l.b16 %v234
      %v895 = vunpack.c.l.b16 %v235
      %v896 = vunpack.c.l.b16 %v236
      %v897 = vunpack.c.l.b16 %v237
      %v898 = vunpack.c.l.b16 %v238
      %v899 = vunpack.c.l.b16 %v239
      %v900 = vunpack.c.l.b16 %v240
      %v901 = vunpack.c.l.b16 %v241
      %v902 = vunpack.c.l.b16 %v242
      %v903 = vunpack.c.l.b16 %v243
      %v904 = vunpack.c.l.b16 %v244
      %v905 = vunpack.c.l.b16 %v245
      %v906 = vunpack.c.l.b16 %v246
      %v907 = vunpack.c.l.b16 %v247
      %v908 = vpack.c.b16 %v877, %v876
      %v909 = vpack.c.b16 %v879, %v878
      %v910 = vpack.c.b16 %v881, %v880
      %v911 = vpack.c.b16 %v883, %v882
      %v912 = vpack.c.b16 %v885, %v884
      %v913 = vpack.c.b16 %v887, %v886
      %v914 = vpack.c.b16 %v889, %v888
      %v915 = vpack.c.b16 %v891, %v890
      %v916 = vpack.c.b16 %v893, %v892
      %v917 = vpack.c.b16 %v895, %v894
      %v918 = vpack.c.b16 %v897, %v896
      %v919 = vpack.c.b16 %v899, %v898
      %v920 = vpack.c.b16 %v901, %v900
      %v921 = vpack.c.b16 %v903, %v902
      %v922 = vpack.c.b16 %v905, %v904
      %v923 = vpack.c.b16 %v907, %v906
      %v925 = vsel %vm702, %v908, 0
      %v928 = vsel %vm702, %v909, 0
      %v931 = vsel %vm702, %v910, 0
      %v934 = vsel %vm702, %v911, 0
      %v937 = vsel %vm702, %v912, 0
      %v940 = vsel %vm702, %v913, 0
      %v943 = vsel %vm702, %v914, 0
      %v946 = vsel %vm702, %v915, 0
      %v949 = vsel %vm702, %v916, 0
      %v952 = vsel %vm702, %v917, 0
      %v955 = vsel %vm702, %v918, 0
      %v958 = vsel %vm702, %v919, 0
      %v961 = vsel %vm702, %v920, 0
      %v964 = vsel %vm702, %v921, 0
      %v967 = vsel %vm702, %v922, 0
      %v970 = vsel %vm702, %v923, 0
      %v973 = vsel %vm751, %v248, 0
      %975 = vmatpush.bf16.msra.mxu0 0
      %976 = vmatpush.bf16.msra.mxu0 0
      %977 = vmatpush.bf16.msra.mxu0 0
      %978 = vmatpush.bf16.msra.mxu0 0
      %979 = vmatpush.bf16.msra.mxu0 0
      %980 = vmatpush.bf16.msra.mxu0 0
      %981 = vmatpush.bf16.msra.mxu0 0
      %982 = vmatpush.bf16.msra.mxu0 %v973
      %983 = vmatmul.bf16.gmra.mxu0 %v925
      %v984 = vpop.f32.mrf.mxu0
      %v985 = vadd.f32 %v765, %v984
      %v986 = vpop.f32.mrf.mxu0
      %v987 = vadd.f32 %v767, %v986
      %988 = vmatmul.bf16.gmra.mxu0 %v928
      %v989 = vpop.f32.mrf.mxu0
      %v990 = vadd.f32 %v770, %v989
      %v991 = vpop.f32.mrf.mxu0
      %v992 = vadd.f32 %v772, %v991
      %993 = vmatmul.bf16.gmra.mxu0 %v931
      %v994 = vpop.f32.mrf.mxu0
      %v995 = vadd.f32 %v775, %v994
      %v996 = vpop.f32.mrf.mxu0
      %v997 = vadd.f32 %v777, %v996
      %998 = vmatmul.bf16.gmra.mxu0 %v934
      %v999 = vpop.f32.mrf.mxu0
      %v1000 = vadd.f32 %v780, %v999
      %v1001 = vpop.f32.mrf.mxu0
      %v1002 = vadd.f32 %v782, %v1001
      %1003 = vmatmul.bf16.gmra.mxu0 %v937
      %v1004 = vpop.f32.mrf.mxu0
      %v1005 = vadd.f32 %v785, %v1004
      %v1006 = vpop.f32.mrf.mxu0
      %v1007 = vadd.f32 %v787, %v1006
      %1008 = vmatmul.bf16.gmra.mxu0 %v940
      %v1009 = vpop.f32.mrf.mxu0
      %v1010 = vadd.f32 %v790, %v1009
      %v1011 = vpop.f32.mrf.mxu0
      %v1012 = vadd.f32 %v792, %v1011
      %1013 = vmatmul.bf16.gmra.mxu0 %v943
      %v1014 = vpop.f32.mrf.mxu0
      %v1015 = vadd.f32 %v795, %v1014
      %v1016 = vpop.f32.mrf.mxu0
      %v1017 = vadd.f32 %v797, %v1016
      %1018 = vmatmul.bf16.gmra.mxu0 %v946
      %v1019 = vpop.f32.mrf.mxu0
      %v1020 = vadd.f32 %v800, %v1019
      %v1021 = vpop.f32.mrf.mxu0
      %v1022 = vadd.f32 %v802, %v1021
      %1023 = vmatmul.bf16.gmra.mxu0 %v949
      %v1024 = vpop.f32.mrf.mxu0
      %v1025 = vadd.f32 %v805, %v1024
      %v1026 = vpop.f32.mrf.mxu0
      %v1027 = vadd.f32 %v807, %v1026
      %1028 = vmatmul.bf16.gmra.mxu0 %v952
      %v1029 = vpop.f32.mrf.mxu0
      %v1030 = vadd.f32 %v810, %v1029
      %v1031 = vpop.f32.mrf.mxu0
      %v1032 = vadd.f32 %v812, %v1031
      %1033 = vmatmul.bf16.gmra.mxu0 %v955
      %v1034 = vpop.f32.mrf.mxu0
      %v1035 = vadd.f32 %v815, %v1034
      %v1036 = vpop.f32.mrf.mxu0
      %v1037 = vadd.f32 %v817, %v1036
      %1038 = vmatmul.bf16.gmra.mxu0 %v958
      %v1039 = vpop.f32.mrf.mxu0
      %v1040 = vadd.f32 %v820, %v1039
      %v1041 = vpop.f32.mrf.mxu0
      %v1042 = vadd.f32 %v822, %v1041
      %1043 = vmatmul.bf16.gmra.mxu0 %v961
      %v1044 = vpop.f32.mrf.mxu0
      %v1045 = vadd.f32 %v825, %v1044
      %v1046 = vpop.f32.mrf.mxu0
      %v1047 = vadd.f32 %v827, %v1046
      %1048 = vmatmul.bf16.gmra.mxu0 %v964
      %v1049 = vpop.f32.mrf.mxu0
      %v1050 = vadd.f32 %v830, %v1049
      %v1051 = vpop.f32.mrf.mxu0
      %v1052 = vadd.f32 %v832, %v1051
      %1053 = vmatmul.bf16.gmra.mxu0 %v967
      %v1054 = vpop.f32.mrf.mxu0
      %v1055 = vadd.f32 %v835, %v1054
      %v1056 = vpop.f32.mrf.mxu0
      %v1057 = vadd.f32 %v837, %v1056
      %1058 = vmatmul.bf16.gmra.mxu0 %v970
      %v1059 = vpop.f32.mrf.mxu0
      %v1060 = vadd.f32 %v840, %v1059
      %v1061 = vpop.f32.mrf.mxu0
      %v1062 = vadd.f32 %v842, %v1061
      %1063 = vdwg.mxu0
      %s1064 = scalar_lea.vmem %s203, 12
      %v1065 = vld [vmem:[%s1064] sm:$0xf]
      %v1066 = vld [vmem:[%s1064 + $0x4] sm:$0xf]
      %v1067 = vld [vmem:[%s1064 + $0xc] sm:$0xf]
      %v1068 = vld [vmem:[%s1064 + $0x10] sm:$0xf]
      %v1069 = vld [vmem:[%s1064 + $0x18] sm:$0xf]
      %v1070 = vld [vmem:[%s1064 + $0x1c] sm:$0xf]
      %v1071 = vld [vmem:[%s1064 + $0x24] sm:$0xf]
      %v1072 = vld [vmem:[%s1064 + $0x28] sm:$0xf]
      %v1073 = vld [vmem:[%s1064 + $0x30] sm:$0xf]
      %v1074 = vld [vmem:[%s1064 + $0x34] sm:$0xf]
      %v1075 = vld [vmem:[%s1064 + $0x3c] sm:$0xf]
      %v1076 = vld [vmem:[%s1064 + $0x40] sm:$0xf]
      %v1077 = vld [vmem:[%s1064 + $0x48] sm:$0xf]
      %v1078 = vld [vmem:[%s1064 + $0x4c] sm:$0xf]
      %v1079 = vld [vmem:[%s1064 + $0x54] sm:$0xf]
      %v1080 = vld [vmem:[%s1064 + $0x58] sm:$0xf]
      %v1081 = vld [vmem:[%s1064 + $0x60] sm:$0xf]
      %v1082 = vld [vmem:[%s1064 + $0x64] sm:$0xf]
      %v1083 = vld [vmem:[%s1064 + $0x6c] sm:$0xf]
      %v1084 = vld [vmem:[%s1064 + $0x70] sm:$0xf]
      %v1085 = vld [vmem:[%s1064 + $0x78] sm:$0xf]
      %v1086 = vld [vmem:[%s1064 + $0x7c] sm:$0xf]
      %v1087 = vld [vmem:[%s1064 + $0x84] sm:$0xf]
      %v1088 = vld [vmem:[%s1064 + $0x88] sm:$0xf]
      %v1089 = vld [vmem:[%s1064 + $0x90] sm:$0xf]
      %v1090 = vld [vmem:[%s1064 + $0x94] sm:$0xf]
      %v1091 = vld [vmem:[%s1064 + $0x9c] sm:$0xf]
      %v1092 = vld [vmem:[%s1064 + $0xa0] sm:$0xf]
      %v1093 = vld [vmem:[%s1064 + $0xa8] sm:$0xf]
      %v1094 = vld [vmem:[%s1064 + $0xac] sm:$0xf]
      %v1095 = vld [vmem:[%s1064 + $0xb4] sm:$0xf]
      %v1096 = vld [vmem:[%s1064 + $0xb8] sm:$0xf]
      %s1097 = scalar_lea.vmem %s1, 8
      %v1098 = vld [vmem:[%s1097] sm:$0xf]
      %v1131 = vunpack.c.l.b16 %v1065
      %v1132 = vunpack.c.l.b16 %v1066
      %v1133 = vunpack.c.l.b16 %v1067
      %v1134 = vunpack.c.l.b16 %v1068
      %v1135 = vunpack.c.l.b16 %v1069
      %v1136 = vunpack.c.l.b16 %v1070
      %v1137 = vunpack.c.l.b16 %v1071
      %v1138 = vunpack.c.l.b16 %v1072
      %v1139 = vunpack.c.l.b16 %v1073
      %v1140 = vunpack.c.l.b16 %v1074
      %v1141 = vunpack.c.l.b16 %v1075
      %v1142 = vunpack.c.l.b16 %v1076
      %v1143 = vunpack.c.l.b16 %v1077
      %v1144 = vunpack.c.l.b16 %v1078
      %v1145 = vunpack.c.l.b16 %v1079
      %v1146 = vunpack.c.l.b16 %v1080
      %v1147 = vunpack.c.l.b16 %v1081
      %v1148 = vunpack.c.l.b16 %v1082
      %v1149 = vunpack.c.l.b16 %v1083
      %v1150 = vunpack.c.l.b16 %v1084
      %v1151 = vunpack.c.l.b16 %v1085
      %v1152 = vunpack.c.l.b16 %v1086
      %v1153 = vunpack.c.l.b16 %v1087
      %v1154 = vunpack.c.l.b16 %v1088
      %v1155 = vunpack.c.l.b16 %v1089
      %v1156 = vunpack.c.l.b16 %v1090
      %v1157 = vunpack.c.l.b16 %v1091
      %v1158 = vunpack.c.l.b16 %v1092
      %v1159 = vunpack.c.l.b16 %v1093
      %v1160 = vunpack.c.l.b16 %v1094
      %v1161 = vunpack.c.l.b16 %v1095
      %v1162 = vunpack.c.l.b16 %v1096
      %v1163 = vpack.c.b16 %v1132, %v1131
      %v1164 = vpack.c.b16 %v1134, %v1133
      %v1165 = vpack.c.b16 %v1136, %v1135
      %v1166 = vpack.c.b16 %v1138, %v1137
      %v1167 = vpack.c.b16 %v1140, %v1139
      %v1168 = vpack.c.b16 %v1142, %v1141
      %v1169 = vpack.c.b16 %v1144, %v1143
      %v1170 = vpack.c.b16 %v1146, %v1145
      %v1171 = vpack.c.b16 %v1148, %v1147
      %v1172 = vpack.c.b16 %v1150, %v1149
      %v1173 = vpack.c.b16 %v1152, %v1151
      %v1174 = vpack.c.b16 %v1154, %v1153
      %v1175 = vpack.c.b16 %v1156, %v1155
      %v1176 = vpack.c.b16 %v1158, %v1157
      %v1177 = vpack.c.b16 %v1160, %v1159
      %v1178 = vpack.c.b16 %v1162, %v1161
      %v1180 = vsel %vm702, %v1163, 0
      %v1183 = vsel %vm702, %v1164, 0
      %v1186 = vsel %vm702, %v1165, 0
      %v1189 = vsel %vm702, %v1166, 0
      %v1192 = vsel %vm702, %v1167, 0
      %v1195 = vsel %vm702, %v1168, 0
      %v1198 = vsel %vm702, %v1169, 0
      %v1201 = vsel %vm702, %v1170, 0
      %v1204 = vsel %vm702, %v1171, 0
      %v1207 = vsel %vm702, %v1172, 0
      %v1210 = vsel %vm702, %v1173, 0
      %v1213 = vsel %vm702, %v1174, 0
      %v1216 = vsel %vm702, %v1175, 0
      %v1219 = vsel %vm702, %v1176, 0
      %v1222 = vsel %vm702, %v1177, 0
      %v1225 = vsel %vm702, %v1178, 0
      %v1228 = vsel %vm751, %v1098, 0
      %1230 = vmatpush.bf16.msra.mxu0 0
      %1231 = vmatpush.bf16.msra.mxu0 0
      %1232 = vmatpush.bf16.msra.mxu0 0
      %1233 = vmatpush.bf16.msra.mxu0 0
      %1234 = vmatpush.bf16.msra.mxu0 0
      %1235 = vmatpush.bf16.msra.mxu0 0
      %1236 = vmatpush.bf16.msra.mxu0 0
      %1237 = vmatpush.bf16.msra.mxu0 %v1228
      %1238 = vmatmul.bf16.gmra.mxu0 %v1180
      %v1239 = vpop.f32.mrf.mxu0
      %v1240 = vadd.f32 0.0, %v1239
      %v1241 = vpop.f32.mrf.mxu0
      %v1242 = vadd.f32 0.0, %v1241
      %1243 = vmatmul.bf16.gmra.mxu0 %v1183
      %v1244 = vpop.f32.mrf.mxu0
      %v1245 = vadd.f32 0.0, %v1244
      %v1246 = vpop.f32.mrf.mxu0
      %v1247 = vadd.f32 0.0, %v1246
      %1248 = vmatmul.bf16.gmra.mxu0 %v1186
      %v1249 = vpop.f32.mrf.mxu0
      %v1250 = vadd.f32 0.0, %v1249
      %v1251 = vpop.f32.mrf.mxu0
      %v1252 = vadd.f32 0.0, %v1251
      %1253 = vmatmul.bf16.gmra.mxu0 %v1189
      %v1254 = vpop.f32.mrf.mxu0
      %v1255 = vadd.f32 0.0, %v1254
      %v1256 = vpop.f32.mrf.mxu0
      %v1257 = vadd.f32 0.0, %v1256
      %1258 = vmatmul.bf16.gmra.mxu0 %v1192
      %v1259 = vpop.f32.mrf.mxu0
      %v1260 = vadd.f32 0.0, %v1259
      %v1261 = vpop.f32.mrf.mxu0
      %v1262 = vadd.f32 0.0, %v1261
      %1263 = vmatmul.bf16.gmra.mxu0 %v1195
      %v1264 = vpop.f32.mrf.mxu0
      %v1265 = vadd.f32 0.0, %v1264
      %v1266 = vpop.f32.mrf.mxu0
      %v1267 = vadd.f32 0.0, %v1266
      %1268 = vmatmul.bf16.gmra.mxu0 %v1198
      %v1269 = vpop.f32.mrf.mxu0
      %v1270 = vadd.f32 0.0, %v1269
      %v1271 = vpop.f32.mrf.mxu0
      %v1272 = vadd.f32 0.0, %v1271
      %1273 = vmatmul.bf16.gmra.mxu0 %v1201
      %v1274 = vpop.f32.mrf.mxu0
      %v1275 = vadd.f32 0.0, %v1274
      %v1276 = vpop.f32.mrf.mxu0
      %v1277 = vadd.f32 0.0, %v1276
      %1278 = vmatmul.bf16.gmra.mxu0 %v1204
      %v1279 = vpop.f32.mrf.mxu0
      %v1280 = vadd.f32 0.0, %v1279
      %v1281 = vpop.f32.mrf.mxu0
      %v1282 = vadd.f32 0.0, %v1281
      %1283 = vmatmul.bf16.gmra.mxu0 %v1207
      %v1284 = vpop.f32.mrf.mxu0
      %v1285 = vadd.f32 0.0, %v1284
      %v1286 = vpop.f32.mrf.mxu0
      %v1287 = vadd.f32 0.0, %v1286
      %1288 = vmatmul.bf16.gmra.mxu0 %v1210
      %v1289 = vpop.f32.mrf.mxu0
      %v1290 = vadd.f32 0.0, %v1289
      %v1291 = vpop.f32.mrf.mxu0
      %v1292 = vadd.f32 0.0, %v1291
      %1293 = vmatmul.bf16.gmra.mxu0 %v1213
      %v1294 = vpop.f32.mrf.mxu0
      %v1295 = vadd.f32 0.0, %v1294
      %v1296 = vpop.f32.mrf.mxu0
      %v1297 = vadd.f32 0.0, %v1296
      %1298 = vmatmul.bf16.gmra.mxu0 %v1216
      %v1299 = vpop.f32.mrf.mxu0
      %v1300 = vadd.f32 0.0, %v1299
      %v1301 = vpop.f32.mrf.mxu0
      %v1302 = vadd.f32 0.0, %v1301
      %1303 = vmatmul.bf16.gmra.mxu0 %v1219
      %v1304 = vpop.f32.mrf.mxu0
      %v1305 = vadd.f32 0.0, %v1304
      %v1306 = vpop.f32.mrf.mxu0
      %v1307 = vadd.f32 0.0, %v1306
      %1308 = vmatmul.bf16.gmra.mxu0 %v1222
      %v1309 = vpop.f32.mrf.mxu0
      %v1310 = vadd.f32 0.0, %v1309
      %v1311 = vpop.f32.mrf.mxu0
      %v1312 = vadd.f32 0.0, %v1311
      %1313 = vmatmul.bf16.gmra.mxu0 %v1225
      %v1314 = vpop.f32.mrf.mxu0
      %v1315 = vadd.f32 0.0, %v1314
      %v1316 = vpop.f32.mrf.mxu0
      %v1317 = vadd.f32 0.0, %v1316
      %1318 = vdwg.mxu0
      %v1319 = vadd.f32 %v985, %v1240
      %v1320 = vadd.f32 %v987, %v1242
      %v1321 = vadd.f32 %v990, %v1245
      %v1322 = vadd.f32 %v992, %v1247
      %v1323 = vadd.f32 %v995, %v1250
      %v1324 = vadd.f32 %v997, %v1252
      %v1325 = vadd.f32 %v1000, %v1255
      %v1326 = vadd.f32 %v1002, %v1257
      %v1327 = vadd.f32 %v1005, %v1260
      %v1328 = vadd.f32 %v1007, %v1262
      %v1329 = vadd.f32 %v1010, %v1265
      %v1330 = vadd.f32 %v1012, %v1267
      %v1331 = vadd.f32 %v1015, %v1270
      %v1332 = vadd.f32 %v1017, %v1272
      %v1333 = vadd.f32 %v1020, %v1275
      %v1334 = vadd.f32 %v1022, %v1277
      %v1335 = vadd.f32 %v1025, %v1280
      %v1336 = vadd.f32 %v1027, %v1282
      %v1337 = vadd.f32 %v1030, %v1285
      %v1338 = vadd.f32 %v1032, %v1287
      %v1339 = vadd.f32 %v1035, %v1290
      %v1340 = vadd.f32 %v1037, %v1292
      %v1341 = vadd.f32 %v1040, %v1295
      %v1342 = vadd.f32 %v1042, %v1297
      %v1343 = vadd.f32 %v1045, %v1300
      %v1344 = vadd.f32 %v1047, %v1302
      %v1345 = vadd.f32 %v1050, %v1305
      %v1346 = vadd.f32 %v1052, %v1307
      %v1347 = vadd.f32 %v1055, %v1310
      %v1348 = vadd.f32 %v1057, %v1312
      %v1349 = vadd.f32 %v1060, %v1315
      %v1350 = vadd.f32 %v1062, %v1317
      %v1351 = vld [vmem:[%s1064] sm:$0xf]
      %v1352 = vld [vmem:[%s1064 + $0x4] sm:$0xf]
      %v1353 = vld [vmem:[%s1064 + $0x8] sm:$0x1]
      %v1354 = vld [vmem:[%s1064 + $0xc] sm:$0xf]
      %v1355 = vld [vmem:[%s1064 + $0x10] sm:$0xf]
      %v1356 = vld [vmem:[%s1064 + $0x14] sm:$0x1]
      %v1357 = vld [vmem:[%s1064 + $0x18] sm:$0xf]
      %v1358 = vld [vmem:[%s1064 + $0x1c] sm:$0xf]
      %v1359 = vld [vmem:[%s1064 + $0x20] sm:$0x1]
      %v1360 = vld [vmem:[%s1064 + $0x24] sm:$0xf]
      %v1361 = vld [vmem:[%s1064 + $0x28] sm:$0xf]
      %v1362 = vld [vmem:[%s1064 + $0x2c] sm:$0x1]
      %v1363 = vld [vmem:[%s1064 + $0x30] sm:$0xf]
      %v1364 = vld [vmem:[%s1064 + $0x34] sm:$0xf]
      %v1365 = vld [vmem:[%s1064 + $0x38] sm:$0x1]
      %v1366 = vld [vmem:[%s1064 + $0x3c] sm:$0xf]
      %v1367 = vld [vmem:[%s1064 + $0x40] sm:$0xf]
      %v1368 = vld [vmem:[%s1064 + $0x44] sm:$0x1]
      %v1369 = vld [vmem:[%s1064 + $0x48] sm:$0xf]
      %v1370 = vld [vmem:[%s1064 + $0x4c] sm:$0xf]
      %v1371 = vld [vmem:[%s1064 + $0x50] sm:$0x1]
      %v1372 = vld [vmem:[%s1064 + $0x54] sm:$0xf]
      %v1373 = vld [vmem:[%s1064 + $0x58] sm:$0xf]
      %v1374 = vld [vmem:[%s1064 + $0x5c] sm:$0x1]
      %v1375 = vld [vmem:[%s1064 + $0x60] sm:$0xf]
      %v1376 = vld [vmem:[%s1064 + $0x64] sm:$0xf]
      %v1377 = vld [vmem:[%s1064 + $0x68] sm:$0x1]
      %v1378 = vld [vmem:[%s1064 + $0x6c] sm:$0xf]
      %v1379 = vld [vmem:[%s1064 + $0x70] sm:$0xf]
      %v1380 = vld [vmem:[%s1064 + $0x74] sm:$0x1]
      %v1381 = vld [vmem:[%s1064 + $0x78] sm:$0xf]
      %v1382 = vld [vmem:[%s1064 + $0x7c] sm:$0xf]
      %v1383 = vld [vmem:[%s1064 + $0x80] sm:$0x1]
      %v1384 = vld [vmem:[%s1064 + $0x84] sm:$0xf]
      %v1385 = vld [vmem:[%s1064 + $0x88] sm:$0xf]
      %v1386 = vld [vmem:[%s1064 + $0x8c] sm:$0x1]
      %v1387 = vld [vmem:[%s1064 + $0x90] sm:$0xf]
      %v1388 = vld [vmem:[%s1064 + $0x94] sm:$0xf]
      %v1389 = vld [vmem:[%s1064 + $0x98] sm:$0x1]
      %v1390 = vld [vmem:[%s1064 + $0x9c] sm:$0xf]
      %v1391 = vld [vmem:[%s1064 + $0xa0] sm:$0xf]
      %v1392 = vld [vmem:[%s1064 + $0xa4] sm:$0x1]
      %v1393 = vld [vmem:[%s1064 + $0xa8] sm:$0xf]
      %v1394 = vld [vmem:[%s1064 + $0xac] sm:$0xf]
      %v1395 = vld [vmem:[%s1064 + $0xb0] sm:$0x1]
      %v1396 = vld [vmem:[%s1064 + $0xb4] sm:$0xf]
      %v1397 = vld [vmem:[%s1064 + $0xb8] sm:$0xf]
      %v1398 = vld [vmem:[%s1064 + $0xbc] sm:$0x1]
      %v1400 = vshrl.u32 %v1351, 16
      %v1402 = vrot.slane %v1400, 4
      %v1403 = vshll.u32 %v1351, 16
      %v1405 = vrot.slane %v1403, 5
      %v1406 = vor.u32 %v1402, %v1405
      %v1407 = vrot.slane %v1406, 4
      %v1409 = vshll.u32 %v1352, 16
      %v1411 = vrot.slane %v1409, 5
      %v1412 = vsel %vm267, %v1407, %v1411
      %v1413 = vshrl.u32 %v1352, 16
      %v1415 = vrot.slane %v1413, 4
      %v1416 = vor.u32 %v1415, %v1411
      %v1417 = vrot.slane %v1416, 4
      %v1419 = vshll.u32 %v1353, 16
      %v1421 = vrot.slane %v1419, 5
      %v1422 = vsel %vm267, %v1417, %v1421
      %v1424 = vshrl.u32 %v1354, 16
      %v1426 = vrot.slane %v1424, 4
      %v1427 = vshll.u32 %v1354, 16
      %v1429 = vrot.slane %v1427, 5
      %v1430 = vor.u32 %v1426, %v1429
      %v1431 = vrot.slane %v1430, 4
      %v1433 = vshll.u32 %v1355, 16
      %v1435 = vrot.slane %v1433, 5
      %v1436 = vsel %vm267, %v1431, %v1435
      %v1437 = vshrl.u32 %v1355, 16
      %v1439 = vrot.slane %v1437, 4
      %v1440 = vor.u32 %v1439, %v1435
      %v1441 = vrot.slane %v1440, 4
      %v1443 = vshll.u32 %v1356, 16
      %v1445 = vrot.slane %v1443, 5
      %v1446 = vsel %vm267, %v1441, %v1445
      %v1448 = vshrl.u32 %v1357, 16
      %v1450 = vrot.slane %v1448, 4
      %v1451 = vshll.u32 %v1357, 16
      %v1453 = vrot.slane %v1451, 5
      %v1454 = vor.u32 %v1450, %v1453
      %v1455 = vrot.slane %v1454, 4
      %v1457 = vshll.u32 %v1358, 16
      %v1459 = vrot.slane %v1457, 5
      %v1460 = vsel %vm267, %v1455, %v1459
      %v1461 = vshrl.u32 %v1358, 16
      %v1463 = vrot.slane %v1461, 4
      %v1464 = vor.u32 %v1463, %v1459
      %v1465 = vrot.slane %v1464, 4
      %v1467 = vshll.u32 %v1359, 16
      %v1469 = vrot.slane %v1467, 5
      %v1470 = vsel %vm267, %v1465, %v1469
      %v1472 = vshrl.u32 %v1360, 16
      %v1474 = vrot.slane %v1472, 4
      %v1475 = vshll.u32 %v1360, 16
      %v1477 = vrot.slane %v1475, 5
      %v1478 = vor.u32 %v1474, %v1477
      %v1479 = vrot.slane %v1478, 4
      %v1481 = vshll.u32 %v1361, 16
      %v1483 = vrot.slane %v1481, 5
      %v1484 = vsel %vm267, %v1479, %v1483
      %v1485 = vshrl.u32 %v1361, 16
      %v1487 = vrot.slane %v1485, 4
      %v1488 = vor.u32 %v1487, %v1483
      %v1489 = vrot.slane %v1488, 4
      %v1491 = vshll.u32 %v1362, 16
      %v1493 = vrot.slane %v1491, 5
      %v1494 = vsel %vm267, %v1489, %v1493
      %v1496 = vshrl.u32 %v1363, 16
      %v1498 = vrot.slane %v1496, 4
      %v1499 = vshll.u32 %v1363, 16
      %v1501 = vrot.slane %v1499, 5
      %v1502 = vor.u32 %v1498, %v1501
      %v1503 = vrot.slane %v1502, 4
      %v1505 = vshll.u32 %v1364, 16
      %v1507 = vrot.slane %v1505, 5
      %v1508 = vsel %vm267, %v1503, %v1507
      %v1509 = vshrl.u32 %v1364, 16
      %v1511 = vrot.slane %v1509, 4
      %v1512 = vor.u32 %v1511, %v1507
      %v1513 = vrot.slane %v1512, 4
      %v1515 = vshll.u32 %v1365, 16
      %v1517 = vrot.slane %v1515, 5
      %v1518 = vsel %vm267, %v1513, %v1517
      %v1520 = vshrl.u32 %v1366, 16
      %v1522 = vrot.slane %v1520, 4
      %v1523 = vshll.u32 %v1366, 16
      %v1525 = vrot.slane %v1523, 5
      %v1526 = vor.u32 %v1522, %v1525
      %v1527 = vrot.slane %v1526, 4
      %v1529 = vshll.u32 %v1367, 16
      %v1531 = vrot.slane %v1529, 5
      %v1532 = vsel %vm267, %v1527, %v1531
      %v1533 = vshrl.u32 %v1367, 16
      %v1535 = vrot.slane %v1533, 4
      %v1536 = vor.u32 %v1535, %v1531
      %v1537 = vrot.slane %v1536, 4
      %v1539 = vshll.u32 %v1368, 16
      %v1541 = vrot.slane %v1539, 5
      %v1542 = vsel %vm267, %v1537, %v1541
      %v1544 = vshrl.u32 %v1369, 16
      %v1546 = vrot.slane %v1544, 4
      %v1547 = vshll.u32 %v1369, 16
      %v1549 = vrot.slane %v1547, 5
      %v1550 = vor.u32 %v1546, %v1549
      %v1551 = vrot.slane %v1550, 4
      %v1553 = vshll.u32 %v1370, 16
      %v1555 = vrot.slane %v1553, 5
      %v1556 = vsel %vm267, %v1551, %v1555
      %v1557 = vshrl.u32 %v1370, 16
      %v1559 = vrot.slane %v1557, 4
      %v1560 = vor.u32 %v1559, %v1555
      %v1561 = vrot.slane %v1560, 4
      %v1563 = vshll.u32 %v1371, 16
      %v1565 = vrot.slane %v1563, 5
      %v1566 = vsel %vm267, %v1561, %v1565
      %v1568 = vshrl.u32 %v1372, 16
      %v1570 = vrot.slane %v1568, 4
      %v1571 = vshll.u32 %v1372, 16
      %v1573 = vrot.slane %v1571, 5
      %v1574 = vor.u32 %v1570, %v1573
      %v1575 = vrot.slane %v1574, 4
      %v1577 = vshll.u32 %v1373, 16
      %v1579 = vrot.slane %v1577, 5
      %v1580 = vsel %vm267, %v1575, %v1579
      %v1581 = vshrl.u32 %v1373, 16
      %v1583 = vrot.slane %v1581, 4
      %v1584 = vor.u32 %v1583, %v1579
      %v1585 = vrot.slane %v1584, 4
      %v1587 = vshll.u32 %v1374, 16
      %v1589 = vrot.slane %v1587, 5
      %v1590 = vsel %vm267, %v1585, %v1589
      %v1592 = vshrl.u32 %v1375, 16
      %v1594 = vrot.slane %v1592, 4
      %v1595 = vshll.u32 %v1375, 16
      %v1597 = vrot.slane %v1595, 5
      %v1598 = vor.u32 %v1594, %v1597
      %v1599 = vrot.slane %v1598, 4
      %v1601 = vshll.u32 %v1376, 16
      %v1603 = vrot.slane %v1601, 5
      %v1604 = vsel %vm267, %v1599, %v1603
      %v1605 = vshrl.u32 %v1376, 16
      %v1607 = vrot.slane %v1605, 4
      %v1608 = vor.u32 %v1607, %v1603
      %v1609 = vrot.slane %v1608, 4
      %v1611 = vshll.u32 %v1377, 16
      %v1613 = vrot.slane %v1611, 5
      %v1614 = vsel %vm267, %v1609, %v1613
      %v1616 = vshrl.u32 %v1378, 16
      %v1618 = vrot.slane %v1616, 4
      %v1619 = vshll.u32 %v1378, 16
      %v1621 = vrot.slane %v1619, 5
      %v1622 = vor.u32 %v1618, %v1621
      %v1623 = vrot.slane %v1622, 4
      %v1625 = vshll.u32 %v1379, 16
      %v1627 = vrot.slane %v1625, 5
      %v1628 = vsel %vm267, %v1623, %v1627
      %v1629 = vshrl.u32 %v1379, 16
      %v1631 = vrot.slane %v1629, 4
      %v1632 = vor.u32 %v1631, %v1627
      %v1633 = vrot.slane %v1632, 4
      %v1635 = vshll.u32 %v1380, 16
      %v1637 = vrot.slane %v1635, 5
      %v1638 = vsel %vm267, %v1633, %v1637
      %v1640 = vshrl.u32 %v1381, 16
      %v1642 = vrot.slane %v1640, 4
      %v1643 = vshll.u32 %v1381, 16
      %v1645 = vrot.slane %v1643, 5
      %v1646 = vor.u32 %v1642, %v1645
      %v1647 = vrot.slane %v1646, 4
      %v1649 = vshll.u32 %v1382, 16
      %v1651 = vrot.slane %v1649, 5
      %v1652 = vsel %vm267, %v1647, %v1651
      %v1653 = vshrl.u32 %v1382, 16
      %v1655 = vrot.slane %v1653, 4
      %v1656 = vor.u32 %v1655, %v1651
      %v1657 = vrot.slane %v1656, 4
      %v1659 = vshll.u32 %v1383, 16
      %v1661 = vrot.slane %v1659, 5
      %v1662 = vsel %vm267, %v1657, %v1661
      %v1664 = vshrl.u32 %v1384, 16
      %v1666 = vrot.slane %v1664, 4
      %v1667 = vshll.u32 %v1384, 16
      %v1669 = vrot.slane %v1667, 5
      %v1670 = vor.u32 %v1666, %v1669
      %v1671 = vrot.slane %v1670, 4
      %v1673 = vshll.u32 %v1385, 16
      %v1675 = vrot.slane %v1673, 5
      %v1676 = vsel %vm267, %v1671, %v1675
      %v1677 = vshrl.u32 %v1385, 16
      %v1679 = vrot.slane %v1677, 4
      %v1680 = vor.u32 %v1679, %v1675
      %v1681 = vrot.slane %v1680, 4
      %v1683 = vshll.u32 %v1386, 16
      %v1685 = vrot.slane %v1683, 5
      %v1686 = vsel %vm267, %v1681, %v1685
      %v1688 = vshrl.u32 %v1387, 16
      %v1690 = vrot.slane %v1688, 4
      %v1691 = vshll.u32 %v1387, 16
      %v1693 = vrot.slane %v1691, 5
      %v1694 = vor.u32 %v1690, %v1693
      %v1695 = vrot.slane %v1694, 4
      %v1697 = vshll.u32 %v1388, 16
      %v1699 = vrot.slane %v1697, 5
      %v1700 = vsel %vm267, %v1695, %v1699
      %v1701 = vshrl.u32 %v1388, 16
      %v1703 = vrot.slane %v1701, 4
      %v1704 = vor.u32 %v1703, %v1699
      %v1705 = vrot.slane %v1704, 4
      %v1707 = vshll.u32 %v1389, 16
      %v1709 = vrot.slane %v1707, 5
      %v1710 = vsel %vm267, %v1705, %v1709
      %v1712 = vshrl.u32 %v1390, 16
      %v1714 = vrot.slane %v1712, 4
      %v1715 = vshll.u32 %v1390, 16
      %v1717 = vrot.slane %v1715, 5
      %v1718 = vor.u32 %v1714, %v1717
      %v1719 = vrot.slane %v1718, 4
      %v1721 = vshll.u32 %v1391, 16
      %v1723 = vrot.slane %v1721, 5
      %v1724 = vsel %vm267, %v1719, %v1723
      %v1725 = vshrl.u32 %v1391, 16
      %v1727 = vrot.slane %v1725, 4
      %v1728 = vor.u32 %v1727, %v1723
      %v1729 = vrot.slane %v1728, 4
      %v1731 = vshll.u32 %v1392, 16
      %v1733 = vrot.slane %v1731, 5
      %v1734 = vsel %vm267, %v1729, %v1733
      %v1736 = vshrl.u32 %v1393, 16
      %v1738 = vrot.slane %v1736, 4
      %v1739 = vshll.u32 %v1393, 16
      %v1741 = vrot.slane %v1739, 5
      %v1742 = vor.u32 %v1738, %v1741
      %v1743 = vrot.slane %v1742, 4
      %v1745 = vshll.u32 %v1394, 16
      %v1747 = vrot.slane %v1745, 5
      %v1748 = vsel %vm267, %v1743, %v1747
      %v1749 = vshrl.u32 %v1394, 16
      %v1751 = vrot.slane %v1749, 4
      %v1752 = vor.u32 %v1751, %v1747
      %v1753 = vrot.slane %v1752, 4
      %v1755 = vshll.u32 %v1395, 16
      %v1757 = vrot.slane %v1755, 5
      %v1758 = vsel %vm267, %v1753, %v1757
      %v1760 = vshrl.u32 %v1396, 16
      %v1762 = vrot.slane %v1760, 4
      %v1763 = vshll.u32 %v1396, 16
      %v1765 = vrot.slane %v1763, 5
      %v1766 = vor.u32 %v1762, %v1765
      %v1767 = vrot.slane %v1766, 4
      %v1769 = vshll.u32 %v1397, 16
      %v1771 = vrot.slane %v1769, 5
      %v1772 = vsel %vm267, %v1767, %v1771
      %v1773 = vshrl.u32 %v1397, 16
      %v1775 = vrot.slane %v1773, 4
      %v1776 = vor.u32 %v1775, %v1771
      %v1777 = vrot.slane %v1776, 4
      %v1779 = vshll.u32 %v1398, 16
      %v1781 = vrot.slane %v1779, 5
      %v1782 = vsel %vm267, %v1777, %v1781
      %s1783 = scalar_lea.vmem %s1, 12
      %v1784 = vld [vmem:[%s1783] sm:$0xf]
      %v1785 = vunpack.c.l.b16 %v1412
      %v1786 = vunpack.c.l.b16 %v1422
      %v1787 = vunpack.c.l.b16 %v1436
      %v1788 = vunpack.c.l.b16 %v1446
      %v1789 = vunpack.c.l.b16 %v1460
      %v1790 = vunpack.c.l.b16 %v1470
      %v1791 = vunpack.c.l.b16 %v1484
      %v1792 = vunpack.c.l.b16 %v1494
      %v1793 = vunpack.c.l.b16 %v1508
      %v1794 = vunpack.c.l.b16 %v1518
      %v1795 = vunpack.c.l.b16 %v1532
      %v1796 = vunpack.c.l.b16 %v1542
      %v1797 = vunpack.c.l.b16 %v1556
      %v1798 = vunpack.c.l.b16 %v1566
      %v1799 = vunpack.c.l.b16 %v1580
      %v1800 = vunpack.c.l.b16 %v1590
      %v1801 = vunpack.c.l.b16 %v1604
      %v1802 = vunpack.c.l.b16 %v1614
      %v1803 = vunpack.c.l.b16 %v1628
      %v1804 = vunpack.c.l.b16 %v1638
      %v1805 = vunpack.c.l.b16 %v1652
      %v1806 = vunpack.c.l.b16 %v1662
      %v1807 = vunpack.c.l.b16 %v1676
      %v1808 = vunpack.c.l.b16 %v1686
      %v1809 = vunpack.c.l.b16 %v1700
      %v1810 = vunpack.c.l.b16 %v1710
      %v1811 = vunpack.c.l.b16 %v1724
      %v1812 = vunpack.c.l.b16 %v1734
      %v1813 = vunpack.c.l.b16 %v1748
      %v1814 = vunpack.c.l.b16 %v1758
      %v1815 = vunpack.c.l.b16 %v1772
      %v1816 = vunpack.c.l.b16 %v1782
      %v1817 = vpack.c.b16 %v1786, %v1785
      %v1818 = vpack.c.b16 %v1788, %v1787
      %v1819 = vpack.c.b16 %v1790, %v1789
      %v1820 = vpack.c.b16 %v1792, %v1791
      %v1821 = vpack.c.b16 %v1794, %v1793
      %v1822 = vpack.c.b16 %v1796, %v1795
      %v1823 = vpack.c.b16 %v1798, %v1797
      %v1824 = vpack.c.b16 %v1800, %v1799
      %v1825 = vpack.c.b16 %v1802, %v1801
      %v1826 = vpack.c.b16 %v1804, %v1803
      %v1827 = vpack.c.b16 %v1806, %v1805
      %v1828 = vpack.c.b16 %v1808, %v1807
      %v1829 = vpack.c.b16 %v1810, %v1809
      %v1830 = vpack.c.b16 %v1812, %v1811
      %v1831 = vpack.c.b16 %v1814, %v1813
      %v1832 = vpack.c.b16 %v1816, %v1815
      %v1834 = vsel %vm702, %v1817, 0
      %v1837 = vsel %vm702, %v1818, 0
      %v1840 = vsel %vm702, %v1819, 0
      %v1843 = vsel %vm702, %v1820, 0
      %v1846 = vsel %vm702, %v1821, 0
      %v1849 = vsel %vm702, %v1822, 0
      %v1852 = vsel %vm702, %v1823, 0
      %v1855 = vsel %vm702, %v1824, 0
      %v1858 = vsel %vm702, %v1825, 0
      %v1861 = vsel %vm702, %v1826, 0
      %v1864 = vsel %vm702, %v1827, 0
      %v1867 = vsel %vm702, %v1828, 0
      %v1870 = vsel %vm702, %v1829, 0
      %v1873 = vsel %vm702, %v1830, 0
      %v1876 = vsel %vm702, %v1831, 0
      %v1879 = vsel %vm702, %v1832, 0
      %v1882 = vsel %vm751, %v1784, 0
      %1884 = vmatpush.bf16.msra.mxu0 0
      %1885 = vmatpush.bf16.msra.mxu0 0
      %1886 = vmatpush.bf16.msra.mxu0 0
      %1887 = vmatpush.bf16.msra.mxu0 0
      %1888 = vmatpush.bf16.msra.mxu0 0
      %1889 = vmatpush.bf16.msra.mxu0 0
      %1890 = vmatpush.bf16.msra.mxu0 0
      %1891 = vmatpush.bf16.msra.mxu0 %v1882
      %1892 = vmatmul.bf16.gmra.mxu0 %v1834
      %v1893 = vpop.f32.mrf.mxu0
      %v1894 = vadd.f32 0.0, %v1893
      %v1895 = vpop.f32.mrf.mxu0
      %v1896 = vadd.f32 0.0, %v1895
      %1897 = vmatmul.bf16.gmra.mxu0 %v1837
      %v1898 = vpop.f32.mrf.mxu0
      %v1899 = vadd.f32 0.0, %v1898
      %v1900 = vpop.f32.mrf.mxu0
      %v1901 = vadd.f32 0.0, %v1900
      %1902 = vmatmul.bf16.gmra.mxu0 %v1840
      %v1903 = vpop.f32.mrf.mxu0
      %v1904 = vadd.f32 0.0, %v1903
      %v1905 = vpop.f32.mrf.mxu0
      %v1906 = vadd.f32 0.0, %v1905
      %1907 = vmatmul.bf16.gmra.mxu0 %v1843
      %v1908 = vpop.f32.mrf.mxu0
      %v1909 = vadd.f32 0.0, %v1908
      %v1910 = vpop.f32.mrf.mxu0
      %v1911 = vadd.f32 0.0, %v1910
      %1912 = vmatmul.bf16.gmra.mxu0 %v1846
      %v1913 = vpop.f32.mrf.mxu0
      %v1914 = vadd.f32 0.0, %v1913
      %v1915 = vpop.f32.mrf.mxu0
      %v1916 = vadd.f32 0.0, %v1915
      %1917 = vmatmul.bf16.gmra.mxu0 %v1849
      %v1918 = vpop.f32.mrf.mxu0
      %v1919 = vadd.f32 0.0, %v1918
      %v1920 = vpop.f32.mrf.mxu0
      %v1921 = vadd.f32 0.0, %v1920
      %1922 = vmatmul.bf16.gmra.mxu0 %v1852
      %v1923 = vpop.f32.mrf.mxu0
      %v1924 = vadd.f32 0.0, %v1923
      %v1925 = vpop.f32.mrf.mxu0
      %v1926 = vadd.f32 0.0, %v1925
      %1927 = vmatmul.bf16.gmra.mxu0 %v1855
      %v1928 = vpop.f32.mrf.mxu0
      %v1929 = vadd.f32 0.0, %v1928
      %v1930 = vpop.f32.mrf.mxu0
      %v1931 = vadd.f32 0.0, %v1930
      %1932 = vmatmul.bf16.gmra.mxu0 %v1858
      %v1933 = vpop.f32.mrf.mxu0
      %v1934 = vadd.f32 0.0, %v1933
      %v1935 = vpop.f32.mrf.mxu0
      %v1936 = vadd.f32 0.0, %v1935
      %1937 = vmatmul.bf16.gmra.mxu0 %v1861
      %v1938 = vpop.f32.mrf.mxu0
      %v1939 = vadd.f32 0.0, %v1938
      %v1940 = vpop.f32.mrf.mxu0
      %v1941 = vadd.f32 0.0, %v1940
      %1942 = vmatmul.bf16.gmra.mxu0 %v1864
      %v1943 = vpop.f32.mrf.mxu0
      %v1944 = vadd.f32 0.0, %v1943
      %v1945 = vpop.f32.mrf.mxu0
      %v1946 = vadd.f32 0.0, %v1945
      %1947 = vmatmul.bf16.gmra.mxu0 %v1867
      %v1948 = vpop.f32.mrf.mxu0
      %v1949 = vadd.f32 0.0, %v1948
      %v1950 = vpop.f32.mrf.mxu0
      %v1951 = vadd.f32 0.0, %v1950
      %1952 = vmatmul.bf16.gmra.mxu0 %v1870
      %v1953 = vpop.f32.mrf.mxu0
      %v1954 = vadd.f32 0.0, %v1953
      %v1955 = vpop.f32.mrf.mxu0
      %v1956 = vadd.f32 0.0, %v1955
      %1957 = vmatmul.bf16.gmra.mxu0 %v1873
      %v1958 = vpop.f32.mrf.mxu0
      %v1959 = vadd.f32 0.0, %v1958
      %v1960 = vpop.f32.mrf.mxu0
      %v1961 = vadd.f32 0.0, %v1960
      %1962 = vmatmul.bf16.gmra.mxu0 %v1876
      %v1963 = vpop.f32.mrf.mxu0
      %v1964 = vadd.f32 0.0, %v1963
      %v1965 = vpop.f32.mrf.mxu0
      %v1966 = vadd.f32 0.0, %v1965
      %1967 = vmatmul.bf16.gmra.mxu0 %v1879
      %v1968 = vpop.f32.mrf.mxu0
      %v1969 = vadd.f32 0.0, %v1968
      %v1970 = vpop.f32.mrf.mxu0
      %v1971 = vadd.f32 0.0, %v1970
      %1972 = vdwg.mxu0
      %v1973 = vadd.f32 %v1319, %v1894
      %v1974 = vadd.f32 %v1320, %v1896
      %v1975 = vadd.f32 %v1321, %v1899
      %v1976 = vadd.f32 %v1322, %v1901
      %v1977 = vadd.f32 %v1323, %v1904
      %v1978 = vadd.f32 %v1324, %v1906
      %v1979 = vadd.f32 %v1325, %v1909
      %v1980 = vadd.f32 %v1326, %v1911
      %v1981 = vadd.f32 %v1327, %v1914
      %v1982 = vadd.f32 %v1328, %v1916
      %v1983 = vadd.f32 %v1329, %v1919
      %v1984 = vadd.f32 %v1330, %v1921
      %v1985 = vadd.f32 %v1331, %v1924
      %v1986 = vadd.f32 %v1332, %v1926
      %v1987 = vadd.f32 %v1333, %v1929
      %v1988 = vadd.f32 %v1334, %v1931
      %v1989 = vadd.f32 %v1335, %v1934
      %v1990 = vadd.f32 %v1336, %v1936
      %v1991 = vadd.f32 %v1337, %v1939
      %v1992 = vadd.f32 %v1338, %v1941
      %v1993 = vadd.f32 %v1339, %v1944
      %v1994 = vadd.f32 %v1340, %v1946
      %v1995 = vadd.f32 %v1341, %v1949
      %v1996 = vadd.f32 %v1342, %v1951
      %v1997 = vadd.f32 %v1343, %v1954
      %v1998 = vadd.f32 %v1344, %v1956
      %v1999 = vadd.f32 %v1345, %v1959
      %v2000 = vadd.f32 %v1346, %v1961
      %v2001 = vadd.f32 %v1347, %v1964
      %v2002 = vadd.f32 %v1348, %v1966
      %v2003 = vadd.f32 %v1349, %v1969
      %v2004 = vadd.f32 %v1350, %v1971
      %v2005 = vpack.c.bf16 %v1973, %v1973
      %v2006 = vpack.c.bf16 %v1974, %v1974
      %v2007 = vpack.c.bf16 %v1975, %v1975
      %v2008 = vpack.c.bf16 %v1976, %v1976
      %v2009 = vpack.c.bf16 %v1977, %v1977
      %v2010 = vpack.c.bf16 %v1978, %v1978
      %v2011 = vpack.c.bf16 %v1979, %v1979
      %v2012 = vpack.c.bf16 %v1980, %v1980
      %v2013 = vpack.c.bf16 %v1981, %v1981
      %v2014 = vpack.c.bf16 %v1982, %v1982
      %v2015 = vpack.c.bf16 %v1983, %v1983
      %v2016 = vpack.c.bf16 %v1984, %v1984
      %v2017 = vpack.c.bf16 %v1985, %v1985
      %v2018 = vpack.c.bf16 %v1986, %v1986
      %v2019 = vpack.c.bf16 %v1987, %v1987
      %v2020 = vpack.c.bf16 %v1988, %v1988
      %v2021 = vpack.c.bf16 %v1989, %v1989
      %v2022 = vpack.c.bf16 %v1990, %v1990
      %v2023 = vpack.c.bf16 %v1991, %v1991
      %v2024 = vpack.c.bf16 %v1992, %v1992
      %v2025 = vpack.c.bf16 %v1993, %v1993
      %v2026 = vpack.c.bf16 %v1994, %v1994
      %v2027 = vpack.c.bf16 %v1995, %v1995
      %v2028 = vpack.c.bf16 %v1996, %v1996
      %v2029 = vpack.c.bf16 %v1997, %v1997
      %v2030 = vpack.c.bf16 %v1998, %v1998
      %v2031 = vpack.c.bf16 %v1999, %v1999
      %v2032 = vpack.c.bf16 %v2000, %v2000
      %v2033 = vpack.c.bf16 %v2001, %v2001
      %v2034 = vpack.c.bf16 %v2002, %v2002
      %v2035 = vpack.c.bf16 %v2003, %v2003
      %v2036 = vpack.c.bf16 %v2004, %v2004
      %2037 = vst [vmem:[%s208] sm:$0xf] %v2005
      %2038 = vst [vmem:[%s208 + $0x4] sm:$0xf] %v2006
      %2039 = vst [vmem:[%s208 + $0x8] sm:$0xf] %v2007
      %2040 = vst [vmem:[%s208 + $0xc] sm:$0xf] %v2008
      %2041 = vst [vmem:[%s208 + $0x10] sm:$0xf] %v2009
      %2042 = vst [vmem:[%s208 + $0x14] sm:$0xf] %v2010
      %2043 = vst [vmem:[%s208 + $0x18] sm:$0xf] %v2011
      %2044 = vst [vmem:[%s208 + $0x1c] sm:$0xf] %v2012
      %2045 = vst [vmem:[%s208 + $0x20] sm:$0xf] %v2013
      %2046 = vst [vmem:[%s208 + $0x24] sm:$0xf] %v2014
      %2047 = vst [vmem:[%s208 + $0x28] sm:$0xf] %v2015
      %2048 = vst [vmem:[%s208 + $0x2c] sm:$0xf] %v2016
      %2049 = vst [vmem:[%s208 + $0x30] sm:$0xf] %v2017
      %2050 = vst [vmem:[%s208 + $0x34] sm:$0xf] %v2018
      %2051 = vst [vmem:[%s208 + $0x38] sm:$0xf] %v2019
      %2052 = vst [vmem:[%s208 + $0x3c] sm:$0xf] %v2020
      %2053 = vst [vmem:[%s208 + $0x40] sm:$0xf] %v2021
      %2054 = vst [vmem:[%s208 + $0x44] sm:$0xf] %v2022
      %2055 = vst [vmem:[%s208 + $0x48] sm:$0xf] %v2023
      %2056 = vst [vmem:[%s208 + $0x4c] sm:$0xf] %v2024
      %2057 = vst [vmem:[%s208 + $0x50] sm:$0xf] %v2025
      %2058 = vst [vmem:[%s208 + $0x54] sm:$0xf] %v2026
      %2059 = vst [vmem:[%s208 + $0x58] sm:$0xf] %v2027
      %2060 = vst [vmem:[%s208 + $0x5c] sm:$0xf] %v2028
      %2061 = vst [vmem:[%s208 + $0x60] sm:$0xf] %v2029
      %2062 = vst [vmem:[%s208 + $0x64] sm:$0xf] %v2030
      %2063 = vst [vmem:[%s208 + $0x68] sm:$0xf] %v2031
      %2064 = vst [vmem:[%s208 + $0x6c] sm:$0xf] %v2032
      %2065 = vst [vmem:[%s208 + $0x70] sm:$0xf] %v2033
      %2066 = vst [vmem:[%s208 + $0x74] sm:$0xf] %v2034
      %2067 = vst [vmem:[%s208 + $0x78] sm:$0xf] %v2035
      %2068 = vst [vmem:[%s208 + $0x7c] sm:$0xf] %v2036
      %v2069 = vadd.f32 %v1973, %v1974
      %v2070 = vadd.f32 %v2069, %v1975
      %v2071 = vadd.f32 %v2070, %v1976
      %v2072 = vadd.f32 %v2071, %v1977
      %v2073 = vadd.f32 %v2072, %v1978
      %v2074 = vadd.f32 %v2073, %v1979
      %v2075 = vadd.f32 %v2074, %v1980
      %v2076 = vadd.f32 %v2075, %v1981
      %v2077 = vadd.f32 %v2076, %v1982
      %v2078 = vadd.f32 %v2077, %v1983
      %v2079 = vadd.f32 %v2078, %v1984
      %v2080 = vadd.f32 %v2079, %v1985
      %v2081 = vadd.f32 %v2080, %v1986
      %v2082 = vadd.f32 %v2081, %v1987
      %v2083 = vadd.f32 %v2082, %v1988
      %v2084 = vadd.f32 %v2083, %v1989
      %v2085 = vadd.f32 %v2084, %v1990
      %v2086 = vadd.f32 %v2085, %v1991
      %v2087 = vadd.f32 %v2086, %v1992
      %v2088 = vadd.f32 %v2087, %v1993
      %v2089 = vadd.f32 %v2088, %v1994
      %v2090 = vadd.f32 %v2089, %v1995
      %v2091 = vadd.f32 %v2090, %v1996
      %v2092 = vadd.f32 %v2091, %v1997
      %v2093 = vadd.f32 %v2092, %v1998
      %v2094 = vadd.f32 %v2093, %v1999
      %v2095 = vadd.f32 %v2094, %v2000
      %v2096 = vadd.f32 %v2095, %v2001
      %v2097 = vadd.f32 %v2096, %v2002
      %v2098 = vadd.f32 %v2097, %v2003
      %v2099 = vadd.f32 %v2098, %v2004
      %v2100 = vrot.slane %v2099, 4
      %v2101 = vadd.f32 %v2099, %v2100
      %v2102 = vrot.slane %v2101, 2
      %v2103 = vadd.f32 %v2101, %v2102
      %v2104 = vrot.slane %v2103, 1
      %v2105 = vadd.f32 %v2103, %v2104
      %2106 = vst [vmem:[%s211] sm:$0x1] %v2105
      %v2107 = vmul.f32 %v1973, %v1973
      %v2108 = vmul.f32 %v1974, %v1974
      %v2109 = vmul.f32 %v1975, %v1975
      %v2110 = vmul.f32 %v1976, %v1976
      %v2111 = vmul.f32 %v1977, %v1977
      %v2112 = vmul.f32 %v1978, %v1978
      %v2113 = vmul.f32 %v1979, %v1979
      %v2114 = vmul.f32 %v1980, %v1980
      %v2115 = vmul.f32 %v1981, %v1981
      %v2116 = vmul.f32 %v1982, %v1982
      %v2117 = vmul.f32 %v1983, %v1983
      %v2118 = vmul.f32 %v1984, %v1984
      %v2119 = vmul.f32 %v1985, %v1985
      %v2120 = vmul.f32 %v1986, %v1986
      %v2121 = vmul.f32 %v1987, %v1987
      %v2122 = vmul.f32 %v1988, %v1988
      %v2123 = vmul.f32 %v1989, %v1989
      %v2124 = vmul.f32 %v1990, %v1990
      %v2125 = vmul.f32 %v1991, %v1991
      %v2126 = vmul.f32 %v1992, %v1992
      %v2127 = vmul.f32 %v1993, %v1993
      %v2128 = vmul.f32 %v1994, %v1994
      %v2129 = vmul.f32 %v1995, %v1995
      %v2130 = vmul.f32 %v1996, %v1996
      %v2131 = vmul.f32 %v1997, %v1997
      %v2132 = vmul.f32 %v1998, %v1998
      %v2133 = vmul.f32 %v1999, %v1999
      %v2134 = vmul.f32 %v2000, %v2000
      %v2135 = vmul.f32 %v2001, %v2001
      %v2136 = vmul.f32 %v2002, %v2002
      %v2137 = vmul.f32 %v2003, %v2003
      %v2138 = vmul.f32 %v2004, %v2004
      %v2139 = vadd.f32 %v2107, %v2108
      %v2140 = vadd.f32 %v2139, %v2109
      %v2141 = vadd.f32 %v2140, %v2110
      %v2142 = vadd.f32 %v2141, %v2111
      %v2143 = vadd.f32 %v2142, %v2112
      %v2144 = vadd.f32 %v2143, %v2113
      %v2145 = vadd.f32 %v2144, %v2114
      %v2146 = vadd.f32 %v2145, %v2115
      %v2147 = vadd.f32 %v2146, %v2116
      %v2148 = vadd.f32 %v2147, %v2117
      %v2149 = vadd.f32 %v2148, %v2118
      %v2150 = vadd.f32 %v2149, %v2119
      %v2151 = vadd.f32 %v2150, %v2120
      %v2152 = vadd.f32 %v2151, %v2121
      %v2153 = vadd.f32 %v2152, %v2122
      %v2154 = vadd.f32 %v2153, %v2123
      %v2155 = vadd.f32 %v2154, %v2124
      %v2156 = vadd.f32 %v2155, %v2125
      %v2157 = vadd.f32 %v2156, %v2126
      %v2158 = vadd.f32 %v2157, %v2127
      %v2159 = vadd.f32 %v2158, %v2128
      %v2160 = vadd.f32 %v2159, %v2129
      %v2161 = vadd.f32 %v2160, %v2130
      %v2162 = vadd.f32 %v2161, %v2131
      %v2163 = vadd.f32 %v2162, %v2132
      %v2164 = vadd.f32 %v2163, %v2133
      %v2165 = vadd.f32 %v2164, %v2134
      %v2166 = vadd.f32 %v2165, %v2135
      %v2167 = vadd.f32 %v2166, %v2136
      %v2168 = vadd.f32 %v2167, %v2137
      %v2169 = vadd.f32 %v2168, %v2138
      %v2170 = vrot.slane %v2169, 4
      %v2171 = vadd.f32 %v2169, %v2170
      %v2172 = vrot.slane %v2171, 2
      %v2173 = vadd.f32 %v2171, %v2172
      %v2174 = vrot.slane %v2173, 1
      %v2175 = vadd.f32 %v2173, %v2174
      %2176 = vst [vmem:[%s214] sm:$0x1] %v2175
      %p2177 = scmp.lt.s32.totalorder %s16, 1
      %s2178 = scalar_select %p2177, %s16, 1
      %s2179 = smul.addr %s2178, 32
      %s2180 = smul.addr %s2179, 4
      %s2181 = scalar_lea.vmem %s2, %s2180
      %p2182 = scmp.lt.s32.totalorder %s16, 1
      %s2183 = scalar_select %p2182, %s16, 1
      %s2184 = scalar_lea.vmem %s3, %s2183
      %p2185 = scmp.lt.s32.totalorder %s16, 1
      %s2186 = scalar_select %p2185, %s16, 1
      %s2187 = scalar_lea.vmem %s4, %s2186
      // Predicated region
      $region29: #{deconv_block.2} parent=27 // pred_check
        %p2188 = pneg %p81
      $region30: #{deconv_block.2} parent=27 // pred_check_branch
        %2190 = sbr.rel (%p2188) target = $region32
      $region31: #{deconv_block.2} parent=27 // pred_region
        _
      $region32: #{deconv_block.2} parent=27 // pred_fallthru
        _
      // Predicated region
      $region33: #{deconv_block.2} parent=27 // pred_check
        %p2191 = pneg %p107
      $region34: #{deconv_block.2} parent=27 // pred_check_branch
        %2193 = sbr.rel (%p2191) target = $region36
      $region35: #{deconv_block.2} parent=27 // pred_region
        _
      $region36: #{deconv_block.2} parent=27 // pred_fallthru
        _
      // Predicated region
      $region37: #{deconv_block.2} parent=27 // pred_check
        %p2194 = pneg %p133
      $region38: #{deconv_block.2} parent=27 // pred_check_branch
        %2196 = sbr.rel (%p2194) target = $region40
      $region39: #{deconv_block.2} parent=27 // pred_region
        _
      $region40: #{deconv_block.2} parent=27 // pred_fallthru
        _
    $region28: #{deconv_block.2} parent=5 // pred_fallthru
      _
    %p2197 = scmp.le.s32.totalorder 2, %s11
    // Predicated region
    $region41: #{deconv_block.2} parent=5 // pred_check
      %p2198 = pneg %p2197
    $region42: #{deconv_block.2} parent=5 // pred_check_branch
      %2200 = sbr.rel (%p2198) target = $region44
    $region43: #{deconv_block.2} parent=5 // pred_region
      %s2201 = ssub.s32 %s11, 2
      // Predicated region
      $region45: #{deconv_block.2} parent=43 // pred_check
        %p2202 = pneg %p87
      $region46: #{deconv_block.2} parent=43 // pred_check_branch
        %2204 = sbr.rel (%p2202) target = $region48
      $region47: #{deconv_block.2} parent=43 // pred_region
        %p2205 = scmp.lt.s32.totalorder %s17, 1
        %s2206 = scalar_select %p2205, %s17, 1
        %s2207 = smul.addr %s2206, 32
        %s2208 = smul.addr %s2207, 4
        %s2209 = scalar_lea.vmem %s2, %s2208
      $region48: #{deconv_block.2} parent=43 // pred_fallthru
        _
      // Predicated region
      $region49: #{deconv_block.2} parent=43 // pred_check
        %p2210 = pneg %p113
      $region50: #{deconv_block.2} parent=43 // pred_check_branch
        %2212 = sbr.rel (%p2210) target = $region52
      $region51: #{deconv_block.2} parent=43 // pred_region
        %p2213 = scmp.lt.s32.totalorder %s17, 1
        %s2214 = scalar_select %p2213, %s17, 1
        %s2215 = scalar_lea.vmem %s3, %s2214
      $region52: #{deconv_block.2} parent=43 // pred_fallthru
        _
      // Predicated region
      $region53: #{deconv_block.2} parent=43 // pred_check
        %p2216 = pneg %p139
      $region54: #{deconv_block.2} parent=43 // pred_check_branch
        %2218 = sbr.rel (%p2216) target = $region56
      $region55: #{deconv_block.2} parent=43 // pred_region
        %p2219 = scmp.lt.s32.totalorder %s17, 1
        %s2220 = scalar_select %p2219, %s17, 1
        %s2221 = scalar_lea.vmem %s4, %s2220
      $region56: #{deconv_block.2} parent=43 // pred_fallthru
        _
    $region44: #{deconv_block.2} parent=5 // pred_fallthru
      _
  $region6: #{deconv_block.2} parent=0 // loop_footer
    %s15 = sadd.s32 1, %s11
  $region7: #{deconv_block.2} parent=0 // loop_footer_branch
    %10 = sbr.rel target = $region3
  $region8: #{deconv_block.2} parent=0 // loop_exit
    _

</llo_original>
